<compile_context>
chip_gen: v7x
topology: tpu7x:2x2x1
jax: 0.10.0
libtpu: 0.0.40
codegen_flags: <defaults>
</compile_context>

<pallas_src>
import functools
import math

import jax
import jax.numpy as jnp
from jax.experimental import pallas as pl
from jax.experimental.pallas import tpu as pltpu

# MXU operands are cast to this dtype immediately before every jnp.dot.
# Accumulation (preferred_element_type=f32) and all elementwise epilogue math
# stay in f32.  bf16 operands give ~2-3x MXU throughput on v5e/v6e/v7x and
# halve operand VMEM/vld traffic; set to jnp.float32 for bit-level fidelity
# with the PyTorch module.
MATMUL_DTYPE = jnp.bfloat16

_BN_EPS = 1e-5

NOISE_OPT = dict(nc=0, nf=16, nb=2, dim=3, spatial=True, head_k=3, body_k=3,
                 mix=True, zero_init=False)
SCALE = 4


@functools.lru_cache(maxsize=None)
def _vmem_limit_bytes():
    """~75% of physical VMEM (v5e/v6e: 128 MiB, v7x: 64 MiB), capped at 100 MiB;
    falls back to the universally safe 32 MiB scoped default."""
    try:
        cap = int(pltpu.get_tpu_info().vmem_capacity_bytes)
        return max(32 * 1024 * 1024, min(int(cap * 0.75), 100 * 1024 * 1024))
    except Exception:
        return 32 * 1024 * 1024


# ----------------------------------------------------------------------------
# Bicubic weights (== F.interpolate(mode='bicubic', align_corners=False))
# ----------------------------------------------------------------------------

def _cubic_weight(x, a=-0.75):
    x = abs(x)
    if x <= 1.0:
        return (a + 2.0) * x ** 3 - (a + 3.0) * x ** 2 + 1.0
    if x < 2.0:
        return a * x ** 3 - 5.0 * a * x ** 2 + 8.0 * a * x - 4.0 * a
    return 0.0


def _bicubic_matrix(in_size, out_size):
    """1-D bicubic resampling matrix (out_size, in_size); PyTorch a=-0.75,
    align_corners=False, antialias=False semantics, border clamped."""
    scale = in_size / out_size
    rows = []
    for i in range(out_size):
        src = (i + 0.5) * scale - 0.5
        fi = math.floor(src)
        t = src - fi
        row = [0.0] * in_size
        for k in range(-1, 3):
            idx = min(max(fi + k, 0), in_size - 1)
            row[idx] += _cubic_weight(k - t)
        rows.append(row)
    return jnp.asarray(rows, jnp.float32)


# ----------------------------------------------------------------------------
# Fused separable bicubic downsample of hf & lf + (blur_x + lf_d) epilogue.
# Emits lf_d directly in the lane-padded flattened (C, P) layout consumed by
# the NoiseModel kernel (no wrapper-side pad / extra HBM round trip).
# ----------------------------------------------------------------------------

def _down_add_kernel(hf_ref, lf_ref, wl_ref, wrt_ref, x_ref, lfd_ref,
                     *, h, w, compute_dtype):
    C = hf_ref.shape[1]
    wl = wl_ref[...].astype(compute_dtype)             # (h, H)  height pass
    wrt = wrt_ref[...].astype(compute_dtype)           # (W, w)  width pass

    # Zero the lane-padded tail once (padded lanes are also masked downstream).
    lfd_ref[...] = jnp.zeros(lfd_ref.shape, lfd_ref.dtype)

    for c in range(C):                                 # C is small & static
        hf_c = hf_ref[0, c].astype(compute_dtype)      # (H, W)
        lf_c = lf_ref[0, c].astype(compute_dtype)
        hf_t = jnp.dot(wl, hf_c, preferred_element_type=jnp.float32)   # (h, W)
        lf_t = jnp.dot(wl, lf_c, preferred_element_type=jnp.float32)
        hf_d = jnp.dot(hf_t.astype(compute_dtype), wrt,
                       preferred_element_type=jnp.float32)             # (h, w)
        lf_d = jnp.dot(lf_t.astype(compute_dtype), wrt,
                       preferred_element_type=jnp.float32)

        x_ref[0, c] = (hf_d + lf_d).astype(x_ref.dtype)  # fused x = blur_x + lf_d

        # Row-major flatten of lf_d into the lane-padded (P,) pixel axis.
        for y in range(h):
            lfd_ref[0, pl.ds(c, 1), pl.ds(y * w, w)] = (
                lf_d[y:y + 1, :].astype(lfd_ref.dtype))


def fused_bicubic_downsample_add(hf, lf, scale, compute_dtype=MATMUL_DTYPE):
    """Separable bicubic downsample of hf and lf with the final add fused in.

    Returns (x, lf_d, (h, w, P)):
      x    : (B, C, h, w)          -- blur_x + lf_d
      lf_d : (B, C, P)             -- flattened row-major pixels, lane-padded
    """
    B, C, H, W = hf.shape
    h, w = H // scale, W // scale
    hw = h * w
    P = ((hw + 127) // 128) * 128                       # lane-dense pixel axis
    wl = _bicubic_matrix(H, h)                          # (h, H)
    wrt = _bicubic_matrix(W, w).T                       # (W, w)

    flops = 2 * B * C * 2 * (h * H * W + h * W * w)     # 2 images x 2 GEMM passes
    bytes_accessed = B * (2 * C * H * W * 4 + (h * H + W * w) * 4
                          + C * h * w * 4 + C * P * 4)

    kern = functools.partial(_down_add_kernel, h=h, w=w,
                             compute_dtype=compute_dtype)
    x, lf_d = pl.pallas_call(
        kern,
        grid=(B,),
        out_shape=(jax.ShapeDtypeStruct((B, C, h, w), hf.dtype),
                   jax.ShapeDtypeStruct((B, C, P), lf.dtype)),
        in_specs=[pl.BlockSpec((1, C, H, W), lambda b: (b, 0, 0, 0)),
                  pl.BlockSpec((1, C, H, W), lambda b: (b, 0, 0, 0)),
                  pl.BlockSpec((h, H), lambda b: (0, 0)),
                  pl.BlockSpec((W, w), lambda b: (0, 0))],
        out_specs=(pl.BlockSpec((1, C, h, w), lambda b: (b, 0, 0, 0)),
                   pl.BlockSpec((1, C, P), lambda b: (b, 0, 0))),
        compiler_params=pltpu.CompilerParams(
            dimension_semantics=("parallel",),
            vmem_limit_bytes=_vmem_limit_bytes()),
        cost_estimate=pl.CostEstimate(flops=int(flops), transcendentals=0,
                                      bytes_accessed=int(bytes_accessed)),
    )(hf, lf, wl, wrt)
    return x, lf_d, (h, w, P)


# ----------------------------------------------------------------------------
# Fully fused NoiseModel: head conv -> BN -> ReLU -> nb x ResBlock -> 1x1 conv
# ----------------------------------------------------------------------------

def _noise_model_kernel(x_ref, hw_ref, hsc_ref, hsh_ref,
                        bw1_ref, bsc1_ref, bsh1_ref, bw2_ref, bsh2_ref,
                        tw_ref, tb_ref, o_ref,
                        *, h, w, nb, head_k, body_k, compute_dtype):
    P = x_ref.shape[-1]                 # lane-padded pixel count (multiple of 128)
    hw_pix = h * w                      # invariant: hw_pix <= P; padded lanes are
                                        # always masked before every dot below.

    # --- boundary masks, hoisted: identical for every conv in the network ----
    pid = jax.lax.broadcasted_iota(jnp.int32, (1, P), 1)
    py = pid // w
    px = pid - py * w
    inb = pid < hw_pix
    r_all = max(head_k, body_k) // 2
    masks = {}
    for dy in range(-r_all, r_all + 1):
        for dx in range(-r_all, r_all + 1):
            masks[(dy, dx)] = ((py + dy >= 0) & (py + dy < h) &
                               (px + dx >= 0) & (px + dx < w) & inb)

    def shifted(act, dy, dx):
        """act[:, p] -> act[:, p + dy*w + dx] with out-of-image pixels zeroed.

        pltpu.roll follows jnp.roll semantics (out[i] = in[i - shift]), so a
        shift of (-s) % P brings the +s neighbour into lane p.  Lanes whose
        neighbour wraps around (or lies in the padded tail) are covered by the
        hoisted boundary masks, so wrap-around content never leaks in."""
        s = dy * w + dx
        src = act if s == 0 else pltpu.roll(act, (-s) % P, axis=1)
        return jnp.where(masks[(dy, dx)], src, 0.0)       # f32 select (VPU)

    def conv_per_tap(act, wtaps, ksize):
        """'same' ksize x ksize conv as ksize^2 small MXU dots.  Used for the
        head conv, where Cin=3 is too shallow to benefit from tap stacking."""
        r = ksize // 2
        out, tap = None, 0
        for dy in range(-r, r + 1):
            for dx in range(-r, r + 1):
                src = shifted(act, dy, dx).astype(compute_dtype)
                acc = jnp.dot(wtaps[tap].astype(compute_dtype), src,
                              preferred_element_type=jnp.float32)
                out = acc if out is None else out + acc
                tap += 1
        return out

    def conv_stacked(act, w_stacked, ksize):
        """'same' ksize x ksize conv as ONE MXU dot with K = ksize^2 * Cin.

        The rolled+masked taps are sublane-stacked (Cin=nf=16 rows per tap, so
        every piece is tile-aligned for f32 and bf16) and contracted against
        weights pre-reshaped to (Cout, ksize^2*Cin)."""
        r = ksize // 2
        taps = []
        for dy in range(-r, r + 1):
            for dx in range(-r, r + 1):
                taps.append(shifted(act, dy, dx).astype(compute_dtype))
        stacked = jnp.concatenate(taps, axis=0)            # (k*k*Cin, P)
        return jnp.dot(w_stacked.astype(compute_dtype), stacked,
                       preferred_element_type=jnp.float32)

    # head: Conv(head_k) -> folded eval-mode BN -> ReLU
    a = conv_per_tap(x_ref[0].astype(jnp.float32), hw_ref[...], head_k)
    a = jnp.maximum(a * hsc_ref[...] + hsh_ref[...], 0.0)

    # body: nb x ResBlock(Conv -> BN -> ReLU -> Conv); skip path never leaves VMEM
    for i in range(nb):
        y = conv_stacked(a, bw1_ref[i], body_k)
        y = jnp.maximum(y * bsc1_ref[i] + bsh1_ref[i], 0.0)
        y = conv_stacked(y, bw2_ref[i], body_k) + bsh2_ref[i]
        a = a + y

    # tail: 1x1 conv to `dim` channels
    out = jnp.dot(tw_ref[...].astype(compute_dtype), a.astype(compute_dtype),
                  preferred_element_type=jnp.float32) + tb_ref[...]
    o_ref[0] = out.astype(o_ref.dtype)


def noise_model_apply(lf_d_flat, params, h, w, compute_dtype=MATMUL_DTYPE):
    """lf_d_flat: (B, C, P) lane-padded flattened downsampled LF image.
    Returns noise (B, dim, P) (padded lanes are undefined; slice [:h*w])."""
    B, C, P = lf_d_flat.shape
    hw = h * w
    assert P % 128 == 0 and hw <= P, "pixel axis must be lane-padded (hw <= P)"
    nf, nb, dim = params['nf'], params['nb'], params['dim']
    head_k, body_k = params['head_k'], params['body_k']

    kern = functools.partial(
        _noise_model_kernel, h=h, w=w, nb=nb, head_k=head_k, body_k=body_k,
        compute_dtype=compute_dtype)

    def const(nd):
        return lambda b: (0,) * nd

    flops = 2 * B * P * (head_k * head_k * C * nf
                         + nb * 2 * (body_k * body_k * nf) * nf
                         + nf * dim)
    wbytes = 4 * (params['head_w'].size + 2 * nf
                  + params['blk_w1'].size + params['blk_w2'].size + 3 * nb * nf
                  + params['tail_w'].size + dim)
    bytes_accessed = B * (C * P * 4 + dim * P * 4 + wbytes)

    out = pl.pallas_call(
        kern,
        grid=(B,),
        out_shape=jax.ShapeDtypeStruct((B, dim, P), lf_d_flat.dtype),
        in_specs=[
            pl.BlockSpec((1, C, P), lambda b: (b, 0, 0)),
            pl.BlockSpec(params['head_w'].shape, const(3)),     # (k*k, nf, C)
            pl.BlockSpec((nf, 1), const(2)),
            pl.BlockSpec((nf, 1), const(2)),
            pl.BlockSpec(params['blk_w1'].shape, const(3)),     # (nb, nf, k*k*nf)
            pl.BlockSpec((nb, nf, 1), const(3)),
            pl.BlockSpec((nb, nf, 1), const(3)),
            pl.BlockSpec(params['blk_w2'].shape, const(3)),     # (nb, nf, k*k*nf)
            pl.BlockSpec((nb, nf, 1), const(3)),
            pl.BlockSpec((dim, nf), const(2)),
            pl.BlockSpec((dim, 1), const(2)),
        ],
        out_specs=pl.BlockSpec((1, dim, P), lambda b: (b, 0, 0)),
        compiler_params=pltpu.CompilerParams(
            dimension_semantics=("parallel",),
            vmem_limit_bytes=_vmem_limit_bytes()),
        cost_estimate=pl.CostEstimate(flops=int(flops), transcendentals=0,
                                      bytes_accessed=int(bytes_accessed)),
    )(lf_d_flat, params['head_w'], params['head_scale'], params['head_shift'],
      params['blk_w1'], params['blk_scale1'], params['blk_shift1'],
      params['blk_w2'], params['blk_shift2'],
      params['tail_w'], params['tail_b'])
    return out


# ----------------------------------------------------------------------------
# NoiseModel parameters (deterministic init, eval-mode BN folded)
# ----------------------------------------------------------------------------

def _fold_bn(conv_bias, gamma, beta, mean, var):
    scale = gamma / jnp.sqrt(var + _BN_EPS)
    shift = (conv_bias - mean) * scale + beta
    return scale, shift


def init_noise_model_params(key, opt, in_nc=3):
    """Deterministic stand-in parameters packed in the kernel's layouts:
       head conv: (k*k, Cout, Cin), tap = (dy+r)*k + (dx+r);
       body convs: taps stacked into (Cout, k*k*Cin) for the single K=k*k*Cin dot
       (a PyTorch (Cout,Cin,k,k) weight maps via transpose(2,3,0,1)->stack);
       per-channel affines (folded eval-mode BN + conv bias) as (C, 1)."""
    nf, nb, dim = opt['nf'], opt['nb'], opt['dim']
    head_k = opt['head_k'] if opt['spatial'] else 1
    body_k = opt['body_k'] if opt['spatial'] else 1
    keys = iter(jax.random.split(key, 4 + 5 * nb))

    def conv_w(k, ks, cin, cout, std=0.1):
        return std * jax.random.normal(k, (ks * ks, cout, cin), jnp.float32)

    def stack_taps(wt):       # (k*k, Cout, Cin) -> (Cout, k*k*Cin), tap-major K
        kk, cout, cin = wt.shape
        return jnp.transpose(wt, (1, 0, 2)).reshape(cout, kk * cin)

    def bn_stats(k, c):
        k1, k2 = jax.random.split(k)
        gamma = 1.0 + 0.05 * jax.random.normal(k1, (c,), jnp.float32)
        beta = 0.05 * jax.random.normal(k2, (c,), jnp.float32)
        return gamma, beta, jnp.zeros((c,), jnp.float32), jnp.ones((c,), jnp.float32)

    p = dict(nf=nf, nb=nb, dim=dim, head_k=head_k, body_k=body_k)

    p['head_w'] = conv_w(next(keys), head_k, in_nc, nf)
    b0 = 0.01 * jax.random.normal(next(keys), (nf,), jnp.float32)
    sc, sh = _fold_bn(b0, *bn_stats(next(keys), nf))
    p['head_scale'], p['head_shift'] = sc.reshape(nf, 1), sh.reshape(nf, 1)

    w1s, sc1s, sh1s, w2s, sh2s = [], [], [], [], []
    for _ in range(nb):
        w1 = conv_w(next(keys), body_k, nf, nf)
        b1 = 0.01 * jax.random.normal(next(keys), (nf,), jnp.float32)
        s1, s1h = _fold_bn(b1, *bn_stats(next(keys), nf))
        w2 = conv_w(next(keys), body_k, nf, nf)
        b2 = 0.01 * jax.random.normal(next(keys), (nf,), jnp.float32)
        w1s.append(stack_taps(w1))
        sc1s.append(s1.reshape(nf, 1))
        sh1s.append(s1h.reshape(nf, 1))
        w2s.append(stack_taps(w2))
        sh2s.append(b2.reshape(nf, 1))
    p['blk_w1'] = jnp.stack(w1s)          # (nb, nf, body_k^2 * nf)
    p['blk_scale1'] = jnp.stack(sc1s)
    p['blk_shift1'] = jnp.stack(sh1s)
    p['blk_w2'] = jnp.stack(w2s)          # (nb, nf, body_k^2 * nf)
    p['blk_shift2'] = jnp.stack(sh2s)

    # Tail 1x1 conv -- zero_init=False path of the reference module:
    # nn.init.normal_(weight, 0.001) is N(mean=0.001, std=1.0) (positional arg
    # is the mean), hence `0.001 + normal`; bias is zero.
    p['tail_w'] = 0.001 + jax.random.normal(next(keys), (dim, nf), jnp.float32)
    p['tail_b'] = jnp.zeros((dim, 1), jnp.float32)
    return p


# ----------------------------------------------------------------------------
# nonDegModel.forward (kernel_opt=None, noise_opt=NOISE_OPT)
# ----------------------------------------------------------------------------

def non_deg_model_forward(hf_inp, lf_inp, noise_params, scale=SCALE):
    """Returns (x, kernel, noise) with NCHW tensors, like the PyTorch module."""
    B, C, H, W = hf_inp.shape
    # blur_x = bicubic(hf), lf_d = bicubic(lf), x = blur_x + lf_d (one fused
    # kernel); lf_d comes back already in the lane-padded flat layout.
    x, lf_d, (h, w, _) = fused_bicubic_downsample_add(hf_inp, lf_inp, scale)
    kernel = None                        # kernel_opt is None -> bicubic branch
    # NoiseModel: nc=0 & mix=True -> its input is exactly lf_d (deterministic).
    noise_flat = noise_model_apply(lf_d, noise_params, h, w)
    noise = noise_flat[:, :, :h * w].reshape(B, noise_params['dim'], h, w)
    # noise_x = lf_d + noise is computed by the reference but never returned.
    return x, kernel, noise


if __name__ == "__main__":
    B, C, H, W = 2, 3, 16, 16
    key = jax.random.PRNGKey(0)
    k_hf, k_lf = jax.random.split(key)
    hf = jax.random.normal(k_hf, (B, C, H, W), jnp.float32)
    lf = jax.random.normal(k_lf, (B, C, H, W), jnp.float32)

    params = init_noise_model_params(jax.random.PRNGKey(42), NOISE_OPT, in_nc=C)

    x, kern, noise = non_deg_model_forward(hf, lf, params, scale=SCALE)
    jax.block_until_ready(x)
    jax.block_until_ready(noise)

    assert x.shape == (B, C, H // SCALE, W // SCALE)
    assert noise.shape == (B, NOISE_OPT['dim'], H // SCALE, W // SCALE)
    assert kern is None
    assert bool(jnp.all(jnp.isfinite(x))) and bool(jnp.all(jnp.isfinite(noise)))
    print("KERNEL_OK")
</pallas_src>

<mosaic_0001>
module attributes {stable_mosaic.version = 11 : i64} {
  func.func @_down_add_kernel(%arg0: i32, %arg1: memref<1x3x16x16xf32, #tpu.memory_space<vmem>>, %arg2: memref<1x3x16x16xf32, #tpu.memory_space<vmem>>, %arg3: memref<4x16xf32, #tpu.memory_space<vmem>>, %arg4: memref<16x4xf32, #tpu.memory_space<vmem>>, %arg5: memref<1x3x4x4xf32, #tpu.memory_space<vmem>>, %arg6: memref<1x3x128xf32, #tpu.memory_space<vmem>>) attributes {dimension_semantics = [#tpu.dimension_semantics<parallel>], iteration_bounds = array<i64: 2>, scalar_prefetch = 0 : i64, scratch_operands = 0 : i64, tpu.core_type = #tpu.core_type<tc>, window_params = [{transform_indices = @transform_0, window_bounds = array<i64: 1, 3, 16, 16>}, {transform_indices = @transform_1, window_bounds = array<i64: 1, 3, 16, 16>}, {pipeline_mode = #tpu.pipeline_mode<synchronous>, transform_indices = @transform_2, window_bounds = array<i64: 4, 16>}, {pipeline_mode = #tpu.pipeline_mode<synchronous>, transform_indices = @transform_3, window_bounds = array<i64: 16, 4>}, {transform_indices = @transform_4, window_bounds = array<i64: 1, 3, 4, 4>}, {transform_indices = @transform_5, window_bounds = array<i64: 1, 3, 128>}]} {
    %c0 = arith.constant 0 : index
    %c0_0 = arith.constant 0 : index
    %0 = vector.load %arg3[%c0, %c0_0] : memref<4x16xf32, #tpu.memory_space<vmem>>, vector<4x16xf32>
    %1 = arith.truncf %0 : vector<4x16xf32> to vector<4x16xbf16>
    %c0_1 = arith.constant 0 : index
    %c0_2 = arith.constant 0 : index
    %2 = vector.load %arg4[%c0_1, %c0_2] : memref<16x4xf32, #tpu.memory_space<vmem>>, vector<16x4xf32>
    %3 = arith.truncf %2 : vector<16x4xf32> to vector<16x4xbf16>
    %cst = arith.constant 0.000000e+00 : f32
    %4 = vector.broadcast %cst : f32 to vector<1x3x128xf32>
    %c0_3 = arith.constant 0 : index
    %c0_4 = arith.constant 0 : index
    %c0_5 = arith.constant 0 : index
    %5 = vector.load %arg6[%c0_3, %c0_4, %c0_5] : memref<1x3x128xf32, #tpu.memory_space<vmem>>, vector<1x3x128xf32>
    tpu.vector_store %arg6[%c0_3, %c0_4, %c0_5], %4 {strides = array<i32>} : memref<1x3x128xf32, #tpu.memory_space<vmem>>, vector<1x3x128xf32>,
    %c0_6 = arith.constant 0 : index
    %c0_7 = arith.constant 0 : index
    %c0_8 = arith.constant 0 : index
    %c0_9 = arith.constant 0 : index
    %6 = vector.load %arg1[%c0_6, %c0_7, %c0_8, %c0_9] : memref<1x3x16x16xf32, #tpu.memory_space<vmem>>, vector<1x1x16x16xf32>
    %7 = vector.shape_cast %6 : vector<1x1x16x16xf32> to vector<16x16xf32>
    %8 = arith.truncf %7 : vector<16x16xf32> to vector<16x16xbf16>
    %c0_10 = arith.constant 0 : index
    %c0_11 = arith.constant 0 : index
    %c0_12 = arith.constant 0 : index
    %c0_13 = arith.constant 0 : index
    %9 = vector.load %arg2[%c0_10, %c0_11, %c0_12, %c0_13] : memref<1x3x16x16xf32, #tpu.memory_space<vmem>>, vector<1x1x16x16xf32>
    %10 = vector.shape_cast %9 : vector<1x1x16x16xf32> to vector<16x16xf32>
    %11 = arith.truncf %10 : vector<16x16xf32> to vector<16x16xbf16>
    %cst_14 = arith.constant dense<0.000000e+00> : vector<4x16xf32>
    %12 = tpu.matmul %1, %8, %cst_14 {dimension_numbers = #tpu.dot_dimension_numbers<[1], [0], [0], [1], [0, 0, 1, 1], [], []>} : vector<4x16xbf16>, vector<16x16xbf16>, vector<4x16xf32> -> vector<4x16xf32>
    %cst_15 = arith.constant dense<0.000000e+00> : vector<4x16xf32>
    %13 = tpu.matmul %1, %11, %cst_15 {dimension_numbers = #tpu.dot_dimension_numbers<[1], [0], [0], [1], [0, 0, 1, 1], [], []>} : vector<4x16xbf16>, vector<16x16xbf16>, vector<4x16xf32> -> vector<4x16xf32>
    %14 = arith.truncf %12 : vector<4x16xf32> to vector<4x16xbf16>
    %cst_16 = arith.constant dense<0.000000e+00> : vector<4x4xf32>
    %15 = tpu.matmul %14, %3, %cst_16 {dimension_numbers = #tpu.dot_dimension_numbers<[1], [0], [0], [1], [0, 0, 1, 1], [], []>} : vector<4x16xbf16>, vector<16x4xbf16>, vector<4x4xf32> -> vector<4x4xf32>
    %16 = arith.truncf %13 : vector<4x16xf32> to vector<4x16xbf16>
    %cst_17 = arith.constant dense<0.000000e+00> : vector<4x4xf32>
    %17 = tpu.matmul %16, %3, %cst_17 {dimension_numbers = #tpu.dot_dimension_numbers<[1], [0], [0], [1], [0, 0, 1, 1], [], []>} : vector<4x16xbf16>, vector<16x4xbf16>, vector<4x4xf32> -> vector<4x4xf32>
    %18 = arith.addf %15, %17 : vector<4x4xf32>
    %c0_18 = arith.constant 0 : index
    %c0_19 = arith.constant 0 : index
    %c0_20 = arith.constant 0 : index
    %c0_21 = arith.constant 0 : index
    %19 = vector.load %arg5[%c0_18, %c0_19, %c0_20, %c0_21] : memref<1x3x4x4xf32, #tpu.memory_space<vmem>>, vector<1x1x4x4xf32>
    %20 = vector.shape_cast %19 : vector<1x1x4x4xf32> to vector<4x4xf32>
    %21 = vector.shape_cast %18 : vector<4x4xf32> to vector<1x1x4x4xf32>
    tpu.vector_store %arg5[%c0_18, %c0_19, %c0_20, %c0_21], %21 {strides = array<i32>} : memref<1x3x4x4xf32, #tpu.memory_space<vmem>>, vector<1x1x4x4xf32>,
    %22 = vector.extract_strided_slice %17 {offsets = [0, 0], sizes = [1, 4], strides = [1, 1]} : vector<4x4xf32> to vector<1x4xf32>
    %c0_22 = arith.constant 0 : index
    %c0_23 = arith.constant 0 : index
    %c0_24 = arith.constant 0 : index
    %23 = vector.load %arg6[%c0_22, %c0_23, %c0_24] : memref<1x3x128xf32, #tpu.memory_space<vmem>>, vector<1x1x4xf32>
    %24 = vector.shape_cast %23 : vector<1x1x4xf32> to vector<1x4xf32>
    %25 = vector.shape_cast %22 : vector<1x4xf32> to vector<1x1x4xf32>
    tpu.vector_store %arg6[%c0_22, %c0_23, %c0_24], %25 {strides = array<i32>} : memref<1x3x128xf32, #tpu.memory_space<vmem>>, vector<1x1x4xf32>,
    %26 = vector.extract_strided_slice %17 {offsets = [1, 0], sizes = [1, 4], strides = [1, 1]} : vector<4x4xf32> to vector<1x4xf32>
    %c0_25 = arith.constant 0 : index
    %c0_26 = arith.constant 0 : index
    %c4 = arith.constant 4 : index
    %27 = vector.load %arg6[%c0_25, %c0_26, %c4] : memref<1x3x128xf32, #tpu.memory_space<vmem>>, vector<1x1x4xf32>
    %28 = vector.shape_cast %27 : vector<1x1x4xf32> to vector<1x4xf32>
    %29 = vector.shape_cast %26 : vector<1x4xf32> to vector<1x1x4xf32>
    tpu.vector_store %arg6[%c0_25, %c0_26, %c4], %29 {strides = array<i32>} : memref<1x3x128xf32, #tpu.memory_space<vmem>>, vector<1x1x4xf32>,
    %30 = vector.extract_strided_slice %17 {offsets = [2, 0], sizes = [1, 4], strides = [1, 1]} : vector<4x4xf32> to vector<1x4xf32>
    %c0_27 = arith.constant 0 : index
    %c0_28 = arith.constant 0 : index
    %c8 = arith.constant 8 : index
    %31 = vector.load %arg6[%c0_27, %c0_28, %c8] : memref<1x3x128xf32, #tpu.memory_space<vmem>>, vector<1x1x4xf32>
    %32 = vector.shape_cast %31 : vector<1x1x4xf32> to vector<1x4xf32>
    %33 = vector.shape_cast %30 : vector<1x4xf32> to vector<1x1x4xf32>
    tpu.vector_store %arg6[%c0_27, %c0_28, %c8], %33 {strides = array<i32>} : memref<1x3x128xf32, #tpu.memory_space<vmem>>, vector<1x1x4xf32>,
    %34 = vector.extract_strided_slice %17 {offsets = [3, 0], sizes = [1, 4], strides = [1, 1]} : vector<4x4xf32> to vector<1x4xf32>
    %c0_29 = arith.constant 0 : index
    %c0_30 = arith.constant 0 : index
    %c12 = arith.constant 12 : index
    %35 = vector.load %arg6[%c0_29, %c0_30, %c12] : memref<1x3x128xf32, #tpu.memory_space<vmem>>, vector<1x1x4xf32>
    %36 = vector.shape_cast %35 : vector<1x1x4xf32> to vector<1x4xf32>
    %37 = vector.shape_cast %34 : vector<1x4xf32> to vector<1x1x4xf32>
    tpu.vector_store %arg6[%c0_29, %c0_30, %c12], %37 {strides = array<i32>} : memref<1x3x128xf32, #tpu.memory_space<vmem>>, vector<1x1x4xf32>,
    %c0_31 = arith.constant 0 : index
    %c1 = arith.constant 1 : index
    %c0_32 = arith.constant 0 : index
    %c0_33 = arith.constant 0 : index
    %38 = vector.load %arg1[%c0_31, %c1, %c0_32, %c0_33] : memref<1x3x16x16xf32, #tpu.memory_space<vmem>>, vector<1x1x16x16xf32>
    %39 = vector.shape_cast %38 : vector<1x1x16x16xf32> to vector<16x16xf32>
    %40 = arith.truncf %39 : vector<16x16xf32> to vector<16x16xbf16>
    %c0_34 = arith.constant 0 : index
    %c1_35 = arith.constant 1 : index
    %c0_36 = arith.constant 0 : index
    %c0_37 = arith.constant 0 : index
    %41 = vector.load %arg2[%c0_34, %c1_35, %c0_36, %c0_37] : memref<1x3x16x16xf32, #tpu.memory_space<vmem>>, vector<1x1x16x16xf32>
    %42 = vector.shape_cast %41 : vector<1x1x16x16xf32> to vector<16x16xf32>
    %43 = arith.truncf %42 : vector<16x16xf32> to vector<16x16xbf16>
    %cst_38 = arith.constant dense<0.000000e+00> : vector<4x16xf32>
    %44 = tpu.matmul %1, %40, %cst_38 {dimension_numbers = #tpu.dot_dimension_numbers<[1], [0], [0], [1], [0, 0, 1, 1], [], []>} : vector<4x16xbf16>, vector<16x16xbf16>, vector<4x16xf32> -> vector<4x16xf32>
    %cst_39 = arith.constant dense<0.000000e+00> : vector<4x16xf32>
    %45 = tpu.matmul %1, %43, %cst_39 {dimension_numbers = #tpu.dot_dimension_numbers<[1], [0], [0], [1], [0, 0, 1, 1], [], []>} : vector<4x16xbf16>, vector<16x16xbf16>, vector<4x16xf32> -> vector<4x16xf32>
    %46 = arith.truncf %44 : vector<4x16xf32> to vector<4x16xbf16>
    %cst_40 = arith.constant dense<0.000000e+00> : vector<4x4xf32>
    %47 = tpu.matmul %46, %3, %cst_40 {dimension_numbers = #tpu.dot_dimension_numbers<[1], [0], [0], [1], [0, 0, 1, 1], [], []>} : vector<4x16xbf16>, vector<16x4xbf16>, vector<4x4xf32> -> vector<4x4xf32>
    %48 = arith.truncf %45 : vector<4x16xf32> to vector<4x16xbf16>
    %cst_41 = arith.constant dense<0.000000e+00> : vector<4x4xf32>
    %49 = tpu.matmul %48, %3, %cst_41 {dimension_numbers = #tpu.dot_dimension_numbers<[1], [0], [0], [1], [0, 0, 1, 1], [], []>} : vector<4x16xbf16>, vector<16x4xbf16>, vector<4x4xf32> -> vector<4x4xf32>
    %50 = arith.addf %47, %49 : vector<4x4xf32>
    %c0_42 = arith.constant 0 : index
    %c1_43 = arith.constant 1 : index
    %c0_44 = arith.constant 0 : index
    %c0_45 = arith.constant 0 : index
    %51 = vector.load %arg5[%c0_42, %c1_43, %c0_44, %c0_45] : memref<1x3x4x4xf32, #tpu.memory_space<vmem>>, vector<1x1x4x4xf32>
    %52 = vector.shape_cast %51 : vector<1x1x4x4xf32> to vector<4x4xf32>
    %53 = vector.shape_cast %50 : vector<4x4xf32> to vector<1x1x4x4xf32>
    tpu.vector_store %arg5[%c0_42, %c1_43, %c0_44, %c0_45], %53 {strides = array<i32>} : memref<1x3x4x4xf32, #tpu.memory_space<vmem>>, vector<1x1x4x4xf32>,
    %54 = vector.extract_strided_slice %49 {offsets = [0, 0], sizes = [1, 4], strides = [1, 1]} : vector<4x4xf32> to vector<1x4xf32>
    %c0_46 = arith.constant 0 : index
    %c1_47 = arith.constant 1 : index
    %c0_48 = arith.constant 0 : index
    %55 = vector.load %arg6[%c0_46, %c1_47, %c0_48] : memref<1x3x128xf32, #tpu.memory_space<vmem>>, vector<1x1x4xf32>
    %56 = vector.shape_cast %55 : vector<1x1x4xf32> to vector<1x4xf32>
    %57 = vector.shape_cast %54 : vector<1x4xf32> to vector<1x1x4xf32>
    tpu.vector_store %arg6[%c0_46, %c1_47, %c0_48], %57 {strides = array<i32>} : memref<1x3x128xf32, #tpu.memory_space<vmem>>, vector<1x1x4xf32>,
    %58 = vector.extract_strided_slice %49 {offsets = [1, 0], sizes = [1, 4], strides = [1, 1]} : vector<4x4xf32> to vector<1x4xf32>
    %c0_49 = arith.constant 0 : index
    %c1_50 = arith.constant 1 : index
    %c4_51 = arith.constant 4 : index
    %59 = vector.load %arg6[%c0_49, %c1_50, %c4_51] : memref<1x3x128xf32, #tpu.memory_space<vmem>>, vector<1x1x4xf32>
    %60 = vector.shape_cast %59 : vector<1x1x4xf32> to vector<1x4xf32>
    %61 = vector.shape_cast %58 : vector<1x4xf32> to vector<1x1x4xf32>
    tpu.vector_store %arg6[%c0_49, %c1_50, %c4_51], %61 {strides = array<i32>} : memref<1x3x128xf32, #tpu.memory_space<vmem>>, vector<1x1x4xf32>,
    %62 = vector.extract_strided_slice %49 {offsets = [2, 0], sizes = [1, 4], strides = [1, 1]} : vector<4x4xf32> to vector<1x4xf32>
    %c0_52 = arith.constant 0 : index
    %c1_53 = arith.constant 1 : index
    %c8_54 = arith.constant 8 : index
    %63 = vector.load %arg6[%c0_52, %c1_53, %c8_54] : memref<1x3x128xf32, #tpu.memory_space<vmem>>, vector<1x1x4xf32>
    %64 = vector.shape_cast %63 : vector<1x1x4xf32> to vector<1x4xf32>
    %65 = vector.shape_cast %62 : vector<1x4xf32> to vector<1x1x4xf32>
    tpu.vector_store %arg6[%c0_52, %c1_53, %c8_54], %65 {strides = array<i32>} : memref<1x3x128xf32, #tpu.memory_space<vmem>>, vector<1x1x4xf32>,
    %66 = vector.extract_strided_slice %49 {offsets = [3, 0], sizes = [1, 4], strides = [1, 1]} : vector<4x4xf32> to vector<1x4xf32>
    %c0_55 = arith.constant 0 : index
    %c1_56 = arith.constant 1 : index
    %c12_57 = arith.constant 12 : index
    %67 = vector.load %arg6[%c0_55, %c1_56, %c12_57] : memref<1x3x128xf32, #tpu.memory_space<vmem>>, vector<1x1x4xf32>
    %68 = vector.shape_cast %67 : vector<1x1x4xf32> to vector<1x4xf32>
    %69 = vector.shape_cast %66 : vector<1x4xf32> to vector<1x1x4xf32>
    tpu.vector_store %arg6[%c0_55, %c1_56, %c12_57], %69 {strides = array<i32>} : memref<1x3x128xf32, #tpu.memory_space<vmem>>, vector<1x1x4xf32>,
    %c0_58 = arith.constant 0 : index
    %c2 = arith.constant 2 : index
    %c0_59 = arith.constant 0 : index
    %c0_60 = arith.constant 0 : index
    %70 = vector.load %arg1[%c0_58, %c2, %c0_59, %c0_60] : memref<1x3x16x16xf32, #tpu.memory_space<vmem>>, vector<1x1x16x16xf32>
    %71 = vector.shape_cast %70 : vector<1x1x16x16xf32> to vector<16x16xf32>
    %72 = arith.truncf %71 : vector<16x16xf32> to vector<16x16xbf16>
    %c0_61 = arith.constant 0 : index
    %c2_62 = arith.constant 2 : index
    %c0_63 = arith.constant 0 : index
    %c0_64 = arith.constant 0 : index
    %73 = vector.load %arg2[%c0_61, %c2_62, %c0_63, %c0_64] : memref<1x3x16x16xf32, #tpu.memory_space<vmem>>, vector<1x1x16x16xf32>
    %74 = vector.shape_cast %73 : vector<1x1x16x16xf32> to vector<16x16xf32>
    %75 = arith.truncf %74 : vector<16x16xf32> to vector<16x16xbf16>
    %cst_65 = arith.constant dense<0.000000e+00> : vector<4x16xf32>
    %76 = tpu.matmul %1, %72, %cst_65 {dimension_numbers = #tpu.dot_dimension_numbers<[1], [0], [0], [1], [0, 0, 1, 1], [], []>} : vector<4x16xbf16>, vector<16x16xbf16>, vector<4x16xf32> -> vector<4x16xf32>
    %cst_66 = arith.constant dense<0.000000e+00> : vector<4x16xf32>
    %77 = tpu.matmul %1, %75, %cst_66 {dimension_numbers = #tpu.dot_dimension_numbers<[1], [0], [0], [1], [0, 0, 1, 1], [], []>} : vector<4x16xbf16>, vector<16x16xbf16>, vector<4x16xf32> -> vector<4x16xf32>
    %78 = arith.truncf %76 : vector<4x16xf32> to vector<4x16xbf16>
    %cst_67 = arith.constant dense<0.000000e+00> : vector<4x4xf32>
    %79 = tpu.matmul %78, %3, %cst_67 {dimension_numbers = #tpu.dot_dimension_numbers<[1], [0], [0], [1], [0, 0, 1, 1], [], []>} : vector<4x16xbf16>, vector<16x4xbf16>, vector<4x4xf32> -> vector<4x4xf32>
    %80 = arith.truncf %77 : vector<4x16xf32> to vector<4x16xbf16>
    %cst_68 = arith.constant dense<0.000000e+00> : vector<4x4xf32>
    %81 = tpu.matmul %80, %3, %cst_68 {dimension_numbers = #tpu.dot_dimension_numbers<[1], [0], [0], [1], [0, 0, 1, 1], [], []>} : vector<4x16xbf16>, vector<16x4xbf16>, vector<4x4xf32> -> vector<4x4xf32>
    %82 = arith.addf %79, %81 : vector<4x4xf32>
    %c0_69 = arith.constant 0 : index
    %c2_70 = arith.constant 2 : index
    %c0_71 = arith.constant 0 : index
    %c0_72 = arith.constant 0 : index
    %83 = vector.load %arg5[%c0_69, %c2_70, %c0_71, %c0_72] : memref<1x3x4x4xf32, #tpu.memory_space<vmem>>, vector<1x1x4x4xf32>
    %84 = vector.shape_cast %83 : vector<1x1x4x4xf32> to vector<4x4xf32>
    %85 = vector.shape_cast %82 : vector<4x4xf32> to vector<1x1x4x4xf32>
    tpu.vector_store %arg5[%c0_69, %c2_70, %c0_71, %c0_72], %85 {strides = array<i32>} : memref<1x3x4x4xf32, #tpu.memory_space<vmem>>, vector<1x1x4x4xf32>,
    %86 = vector.extract_strided_slice %81 {offsets = [0, 0], sizes = [1, 4], strides = [1, 1]} : vector<4x4xf32> to vector<1x4xf32>
    %c0_73 = arith.constant 0 : index
    %c2_74 = arith.constant 2 : index
    %c0_75 = arith.constant 0 : index
    %87 = vector.load %arg6[%c0_73, %c2_74, %c0_75] : memref<1x3x128xf32, #tpu.memory_space<vmem>>, vector<1x1x4xf32>
    %88 = vector.shape_cast %87 : vector<1x1x4xf32> to vector<1x4xf32>
    %89 = vector.shape_cast %86 : vector<1x4xf32> to vector<1x1x4xf32>
    tpu.vector_store %arg6[%c0_73, %c2_74, %c0_75], %89 {strides = array<i32>} : memref<1x3x128xf32, #tpu.memory_space<vmem>>, vector<1x1x4xf32>,
    %90 = vector.extract_strided_slice %81 {offsets = [1, 0], sizes = [1, 4], strides = [1, 1]} : vector<4x4xf32> to vector<1x4xf32>
    %c0_76 = arith.constant 0 : index
    %c2_77 = arith.constant 2 : index
    %c4_78 = arith.constant 4 : index
    %91 = vector.load %arg6[%c0_76, %c2_77, %c4_78] : memref<1x3x128xf32, #tpu.memory_space<vmem>>, vector<1x1x4xf32>
    %92 = vector.shape_cast %91 : vector<1x1x4xf32> to vector<1x4xf32>
    %93 = vector.shape_cast %90 : vector<1x4xf32> to vector<1x1x4xf32>
    tpu.vector_store %arg6[%c0_76, %c2_77, %c4_78], %93 {strides = array<i32>} : memref<1x3x128xf32, #tpu.memory_space<vmem>>, vector<1x1x4xf32>,
    %94 = vector.extract_strided_slice %81 {offsets = [2, 0], sizes = [1, 4], strides = [1, 1]} : vector<4x4xf32> to vector<1x4xf32>
    %c0_79 = arith.constant 0 : index
    %c2_80 = arith.constant 2 : index
    %c8_81 = arith.constant 8 : index
    %95 = vector.load %arg6[%c0_79, %c2_80, %c8_81] : memref<1x3x128xf32, #tpu.memory_space<vmem>>, vector<1x1x4xf32>
    %96 = vector.shape_cast %95 : vector<1x1x4xf32> to vector<1x4xf32>
    %97 = vector.shape_cast %94 : vector<1x4xf32> to vector<1x1x4xf32>
    tpu.vector_store %arg6[%c0_79, %c2_80, %c8_81], %97 {strides = array<i32>} : memref<1x3x128xf32, #tpu.memory_space<vmem>>, vector<1x1x4xf32>,
    %98 = vector.extract_strided_slice %81 {offsets = [3, 0], sizes = [1, 4], strides = [1, 1]} : vector<4x4xf32> to vector<1x4xf32>
    %c0_82 = arith.constant 0 : index
    %c2_83 = arith.constant 2 : index
    %c12_84 = arith.constant 12 : index
    %99 = vector.load %arg6[%c0_82, %c2_83, %c12_84] : memref<1x3x128xf32, #tpu.memory_space<vmem>>, vector<1x1x4xf32>
    %100 = vector.shape_cast %99 : vector<1x1x4xf32> to vector<1x4xf32>
    %101 = vector.shape_cast %98 : vector<1x4xf32> to vector<1x1x4xf32>
    tpu.vector_store %arg6[%c0_82, %c2_83, %c12_84], %101 {strides = array<i32>} : memref<1x3x128xf32, #tpu.memory_space<vmem>>, vector<1x1x4xf32>,
    return
  }
  func.func @transform_0(%arg0: i32) -> (i32, i32, i32, i32) {
    %c0_i32 = arith.constant 0 : i32
    %c0_i32_0 = arith.constant 0 : i32
    %c0_i32_1 = arith.constant 0 : i32
    %c0_i32_2 = arith.constant 0 : i32
    return %arg0, %c0_i32, %c0_i32_0, %c0_i32_1 : i32, i32, i32, i32
  }
  func.func @transform_1(%arg0: i32) -> (i32, i32, i32, i32) {
    %c0_i32 = arith.constant 0 : i32
    %c0_i32_0 = arith.constant 0 : i32
    %c0_i32_1 = arith.constant 0 : i32
    %c0_i32_2 = arith.constant 0 : i32
    return %arg0, %c0_i32, %c0_i32_0, %c0_i32_1 : i32, i32, i32, i32
  }
  func.func @transform_2(%arg0: i32) -> (i32, i32) {
    %c0_i32 = arith.constant 0 : i32
    %c0_i32_0 = arith.constant 0 : i32
    %c0_i32_1 = arith.constant 0 : i32
    return %c0_i32, %c0_i32_0 : i32, i32
  }
  func.func @transform_3(%arg0: i32) -> (i32, i32) {
    %c0_i32 = arith.constant 0 : i32
    %c0_i32_0 = arith.constant 0 : i32
    %c0_i32_1 = arith.constant 0 : i32
    return %c0_i32, %c0_i32_0 : i32, i32
  }
  func.func @transform_4(%arg0: i32) -> (i32, i32, i32, i32) {
    %c0_i32 = arith.constant 0 : i32
    %c0_i32_0 = arith.constant 0 : i32
    %c0_i32_1 = arith.constant 0 : i32
    %c0_i32_2 = arith.constant 0 : i32
    return %arg0, %c0_i32, %c0_i32_0, %c0_i32_1 : i32, i32, i32, i32
  }
  func.func @transform_5(%arg0: i32) -> (i32, i32, i32) {
    %c0_i32 = arith.constant 0 : i32
    %c0_i32_0 = arith.constant 0 : i32
    %c0_i32_1 = arith.constant 0 : i32
    return %arg0, %c0_i32, %c0_i32_0 : i32, i32, i32
  }
}

</mosaic_0001>

<llo_original>
// kernel: tpu_custom_call.1
$region0: #{tpu_custom_call.1}
  #allocation0 [shape = 'u32[]', space=smem, size = 0x4, offset = 0x4, fixed_abs, tag = 'smem constant byte address 0x4 - core index']
  #allocation1 [shape = 'u32[144,128]{1,0:T(1,128)}', space=vmem, size = 0x12000, scoped, tag = 'internal scratch']
  %s0 = inlined_call_operand.hbm [shape: f32[2,3,16,16], index: 0, kind: input, shape index: {}]
  %s1 = inlined_call_operand.hbm [shape: f32[2,3,16,16], index: 1, kind: input, shape index: {}]
  %s2 = inlined_call_operand.vmem [shape: f32[4,16], index: 2, kind: input, shape index: {}]
  %s3 = inlined_call_operand.vmem [shape: f32[16,4], index: 3, kind: input, shape index: {}]
  %s4 = inlined_call_operand.hbm [shape: f32[2,3,4,4], index: 4, kind: output, shape index: {0}]
  %s5 = inlined_call_operand.vmem [shape: f32[2,3,128], index: 5, kind: output, shape index: {1}]
  %6 = xla_tuple %s4, %s5
  %s7 = sld [smem:[#allocation0]]
  $region65: #{tpu_custom_call.1} parent=0
    _
  %s9 = ssub.s32 1, %s7
  %s10 = scalar_select 0, %s9, %s7
  $region1: #{tpu_custom_call.1} parent=0
    #allocation2 [shape = 'u8[49152]{0}', space=vmem, size = 0xc000, scoped, tag = 'input window, operand 0']
    #allocation3 [shape = 's32[2]{0}', space=sflag, size = 0x8, scoped, tag = 'scoped memory for tpu_custom_call.1']
    #allocation4 [shape = 's32[2]{0}', space=sflag, size = 0x8, scoped, tag = 'scoped memory for tpu_custom_call.1']
    #allocation5 [shape = 'u8[49152]{0}', space=vmem, size = 0xc000, scoped, tag = 'input window, operand 1']
    #allocation6 [shape = 's32[2]{0}', space=sflag, size = 0x8, scoped, tag = 'scoped memory for tpu_custom_call.1']
    #allocation7 [shape = 'u8[12288]{0}', space=vmem, size = 0x3000, scoped, tag = 'output window, operand 0']
    %11 = vsyncpa [#allocation3], 0
    %s12 = scalar_lea.sflag [#allocation3], 1
    %13 = vsyncpa %s12, 0
    %14 = vsyncpa [#allocation6], 0
    %s15 = scalar_lea.sflag [#allocation6], 1
    %16 = vsyncpa %s15, 0
    %17 = vsyncpa [#allocation4], 0
    %s18 = scalar_lea.sflag [#allocation4], 1
    %19 = vsyncpa %s18, 0
    loop: start=0, step=1, limit=4
    $region2: #{tpu_custom_call.1} parent=1 // loop_pre_header
      _
    $region3: #{tpu_custom_call.1} parent=1 // loop_header
      %s21 = sphi 0, %s25
      %p22 = scmp.ge.s32.totalorder %s21, 4
      %s31 = sphi 0, %s33
      %s34 = sphi 0, %s31
      %s35 = sphi 0, %s34
      %s51 = sphi 0, %s35
      %s57 = sphi 0, %s59
      %s60 = sphi 0, %s57
      %s61 = sphi 0, %s60
      %s77 = sphi 0, %s61
      %s81 = sphi 0, %s81
      %s83 = sphi 0, %s81
      %s84 = sphi 0, %s83
      %s98 = sphi 0, %s84
      %s102 = sphi 0, %s102
      %s104 = sphi 0, %s102
      %s105 = sphi 0, %s104
      %s119 = sphi 0, %s105
      %s125 = sphi 0, %s127
      %s128 = sphi 0, %s125
      %s129 = sphi 0, %s128
      %s145 = sphi 0, %s129
      %s151 = sphi 0, %s153
      %s154 = sphi 0, %s151
      %s155 = sphi 0, %s154
      %s171 = sphi 0, %s155
    $region4: #{tpu_custom_call.1} parent=1 // loop_header_branch
      %24 = sbr.rel (%p22) target = $region8
    $region5: #{tpu_custom_call.1} parent=1 // loop_body
      %s26 = ssub.s32 %s21, 1
      %s27 = ssub.s32 %s21, 2
      %s28 = sadd.s32 %s21, 1
      %s29 = ssub.s32 %s21, %s28
      %p30 = scmp.eq.s32.totalorder %s29, 0
      %s32 = sadd.s32 %s31, 1
      %s33 = scalar_select %p30, %s31, %s32
      %p36 = pneg %p30
      %p37 = scmp.eq.s32.totalorder %s21, 1
      %p38 = por %p36, %p37
      %p39 = scmp.ne.s32.totalorder %s31, %s34
      %p40 = scmp.eq.s32.totalorder %s21, 0
      %p41 = por %p39, %p40
      %p42 = scmp.ne.s32.totalorder %s31, %s34
      %p43 = scmp.eq.s32.totalorder %s26, 1
      %p44 = por %p42, %p43
      %p45 = scmp.ne.s32.totalorder %s34, %s35
      %p46 = scmp.eq.s32.totalorder %s26, 0
      %p47 = por %p45, %p46
      %p48 = scmp.ne.s32.totalorder %s34, %s35
      %p49 = scmp.eq.s32.totalorder %s27, 1
      %p50 = por %p48, %p49
      %p52 = scmp.ne.s32.totalorder %s35, %s51
      %p53 = scmp.eq.s32.totalorder %s27, 0
      %p54 = por %p52, %p53
      %s55 = ssub.s32 %s21, %s28
      %p56 = scmp.eq.s32.totalorder %s55, 0
      %s58 = sadd.s32 %s57, 1
      %s59 = scalar_select %p56, %s57, %s58
      %p62 = pneg %p56
      %p63 = scmp.eq.s32.totalorder %s21, 1
      %p64 = por %p62, %p63
      %p65 = scmp.ne.s32.totalorder %s57, %s60
      %p66 = scmp.eq.s32.totalorder %s21, 0
      %p67 = por %p65, %p66
      %p68 = scmp.ne.s32.totalorder %s57, %s60
      %p69 = scmp.eq.s32.totalorder %s26, 1
      %p70 = por %p68, %p69
      %p71 = scmp.ne.s32.totalorder %s60, %s61
      %p72 = scmp.eq.s32.totalorder %s26, 0
      %p73 = por %p71, %p72
      %p74 = scmp.ne.s32.totalorder %s60, %s61
      %p75 = scmp.eq.s32.totalorder %s27, 1
      %p76 = por %p74, %p75
      %p78 = scmp.ne.s32.totalorder %s61, %s77
      %p79 = scmp.eq.s32.totalorder %s27, 0
      %p80 = por %p78, %p79
      %s82 = sadd.s32 %s81, 1
      %p85 = scmp.eq.s32.totalorder %s21, 1
      %p86 = scmp.ne.s32.totalorder %s81, %s83
      %p87 = scmp.eq.s32.totalorder %s21, 0
      %p88 = por %p86, %p87
      %p89 = scmp.ne.s32.totalorder %s81, %s83
      %p90 = scmp.eq.s32.totalorder %s26, 1
      %p91 = por %p89, %p90
      %p92 = scmp.ne.s32.totalorder %s83, %s84
      %p93 = scmp.eq.s32.totalorder %s26, 0
      %p94 = por %p92, %p93
      %p95 = scmp.ne.s32.totalorder %s83, %s84
      %p96 = scmp.eq.s32.totalorder %s27, 1
      %p97 = por %p95, %p96
      %p99 = scmp.ne.s32.totalorder %s84, %s98
      %p100 = scmp.eq.s32.totalorder %s27, 0
      %p101 = por %p99, %p100
      %s103 = sadd.s32 %s102, 1
      %p106 = scmp.eq.s32.totalorder %s21, 1
      %p107 = scmp.ne.s32.totalorder %s102, %s104
      %p108 = scmp.eq.s32.totalorder %s21, 0
      %p109 = por %p107, %p108
      %p110 = scmp.ne.s32.totalorder %s102, %s104
      %p111 = scmp.eq.s32.totalorder %s26, 1
      %p112 = por %p110, %p111
      %p113 = scmp.ne.s32.totalorder %s104, %s105
      %p114 = scmp.eq.s32.totalorder %s26, 0
      %p115 = por %p113, %p114
      %p116 = scmp.ne.s32.totalorder %s104, %s105
      %p117 = scmp.eq.s32.totalorder %s27, 1
      %p118 = por %p116, %p117
      %p120 = scmp.ne.s32.totalorder %s105, %s119
      %p121 = scmp.eq.s32.totalorder %s27, 0
      %p122 = por %p120, %p121
      %s123 = ssub.s32 %s21, %s28
      %p124 = scmp.eq.s32.totalorder %s123, 0
      %s126 = sadd.s32 %s125, 1
      %s127 = scalar_select %p124, %s125, %s126
      %p130 = pneg %p124
      %p131 = scmp.eq.s32.totalorder %s21, 1
      %p132 = por %p130, %p131
      %p133 = scmp.ne.s32.totalorder %s125, %s128
      %p134 = scmp.eq.s32.totalorder %s21, 0
      %p135 = por %p133, %p134
      %p136 = scmp.ne.s32.totalorder %s125, %s128
      %p137 = scmp.eq.s32.totalorder %s26, 1
      %p138 = por %p136, %p137
      %p139 = scmp.ne.s32.totalorder %s128, %s129
      %p140 = scmp.eq.s32.totalorder %s26, 0
      %p141 = por %p139, %p140
      %p142 = scmp.ne.s32.totalorder %s128, %s129
      %p143 = scmp.eq.s32.totalorder %s27, 1
      %p144 = por %p142, %p143
      %p146 = scmp.ne.s32.totalorder %s129, %s145
      %p147 = scmp.eq.s32.totalorder %s27, 0
      %p148 = por %p146, %p147
      %s149 = ssub.s32 %s21, %s28
      %p150 = scmp.eq.s32.totalorder %s149, 0
      %s152 = sadd.s32 %s151, 1
      %s153 = scalar_select %p150, %s151, %s152
      %p156 = pneg %p150
      %p157 = scmp.eq.s32.totalorder %s21, 1
      %p158 = por %p156, %p157
      %p159 = scmp.ne.s32.totalorder %s151, %s154
      %p160 = scmp.eq.s32.totalorder %s21, 0
      %p161 = por %p159, %p160
      %p162 = scmp.ne.s32.totalorder %s151, %s154
      %p163 = scmp.eq.s32.totalorder %s26, 1
      %p164 = por %p162, %p163
      %p165 = scmp.ne.s32.totalorder %s154, %s155
      %p166 = scmp.eq.s32.totalorder %s26, 0
      %p167 = por %p165, %p166
      %p168 = scmp.ne.s32.totalorder %s154, %s155
      %p169 = scmp.eq.s32.totalorder %s27, 1
      %p170 = por %p168, %p169
      %p172 = scmp.ne.s32.totalorder %s155, %s171
      %p173 = scmp.eq.s32.totalorder %s27, 0
      %p174 = por %p172, %p173
      %p175 = scmp.le.s32.totalorder 1, %s21
      %p176 = scmp.lt.s32.totalorder %s21, 3
      %p177 = pnand %p175, %p176
      %p178 = pneg %p177
      // Predicated region
      $region9: #{tpu_custom_call.1} parent=5 // pred_check
        _
      $region10: #{tpu_custom_call.1} parent=5 // pred_check_branch
        %180 = sbr.rel (%p177) target = $region12
      $region11: #{tpu_custom_call.1} parent=5 // pred_region
        %s181 = ssub.s32 %s21, 1
        // Predicated region
        $region13: #{tpu_custom_call.1} parent=11 // pred_check
          %p182 = pneg %p94
        $region14: #{tpu_custom_call.1} parent=11 // pred_check_branch
          %184 = sbr.rel (%p182) target = $region16
        $region15: #{tpu_custom_call.1} parent=11 // pred_region
          _
        $region16: #{tpu_custom_call.1} parent=11 // pred_fallthru
          _
        // Predicated region
        $region17: #{tpu_custom_call.1} parent=11 // pred_check
          %p185 = pneg %p115
        $region18: #{tpu_custom_call.1} parent=11 // pred_check_branch
          %187 = sbr.rel (%p185) target = $region20
        $region19: #{tpu_custom_call.1} parent=11 // pred_region
          _
        $region20: #{tpu_custom_call.1} parent=11 // pred_fallthru
          _
      $region12: #{tpu_custom_call.1} parent=5 // pred_fallthru
        _
      %p188 = scmp.lt.s32.totalorder %s21, 2
      // Predicated region
      $region21: #{tpu_custom_call.1} parent=5 // pred_check
        %p189 = pneg %p188
      $region22: #{tpu_custom_call.1} parent=5 // pred_check_branch
        %191 = sbr.rel (%p189) target = $region24
      $region23: #{tpu_custom_call.1} parent=5 // pred_region
        // Predicated region
        $region25: #{tpu_custom_call.1} parent=23 // pred_check
          %p192 = pneg %p41
        $region26: #{tpu_custom_call.1} parent=23 // pred_check_branch
          %194 = sbr.rel (%p192) target = $region28
        $region27: #{tpu_custom_call.1} parent=23 // pred_region
          %s195 = sand.u32 %s31, 1
          %s196 = scalar_lea.sflag [#allocation3], %s195
          %s197 = sand.u32 %s31, 1
          %s198 = smul.addr %s197, 48
          %s199 = scalar_lea.vmem [#allocation2], %s198
          %s201 = ssub.s32 768, 768
          %202 = vsyncadd %s196, %s201
          %s203 = smul.addr %s21, 6
          %s204 = smul.addr %s203, 128
          %s205 = scalar_lea.hbm %s0, %s204
          %s206 = sshll.u32 %s199, 4
          %s207 = int_to_ptr.vmem [resolvable:$true] %s206
          %212 = dma.hbm_to_vmem [thread:$0]  %s205, 768, %s207, %s196, 128, 128, 8
        $region28: #{tpu_custom_call.1} parent=23 // pred_fallthru
          _
        // Predicated region
        $region29: #{tpu_custom_call.1} parent=23 // pred_check
          %p213 = pneg %p67
        $region30: #{tpu_custom_call.1} parent=23 // pred_check_branch
          %215 = sbr.rel (%p213) target = $region32
        $region31: #{tpu_custom_call.1} parent=23 // pred_region
          %s216 = sand.u32 %s57, 1
          %s217 = scalar_lea.sflag [#allocation6], %s216
          %s218 = sand.u32 %s57, 1
          %s219 = smul.addr %s218, 48
          %s220 = scalar_lea.vmem [#allocation5], %s219
          %s222 = ssub.s32 768, 768
          %223 = vsyncadd %s217, %s222
          %s224 = smul.addr %s21, 6
          %s225 = smul.addr %s224, 128
          %s226 = scalar_lea.hbm %s1, %s225
          %s227 = sshll.u32 %s220, 4
          %s228 = int_to_ptr.vmem [resolvable:$true] %s227
          %233 = dma.hbm_to_vmem [thread:$0]  %s226, 768, %s228, %s217, 128, 128, 8
        $region32: #{tpu_custom_call.1} parent=23 // pred_fallthru
          _
      $region24: #{tpu_custom_call.1} parent=5 // pred_fallthru
        _
      %p234 = scmp.le.s32.totalorder 1, %s21
      %p235 = scmp.lt.s32.totalorder %s21, 3
      %p236 = pnand %p234, %p235
      %p237 = pneg %p236
      // Predicated region
      $region33: #{tpu_custom_call.1} parent=5 // pred_check
        _
      $region34: #{tpu_custom_call.1} parent=5 // pred_check_branch
        %239 = sbr.rel (%p236) target = $region36
      $region35: #{tpu_custom_call.1} parent=5 // pred_region
        %s240 = ssub.s32 %s21, 1
        %s241 = sand.u32 %s34, 1
        %s242 = scalar_lea.sflag [#allocation3], %s241
        %s243 = sand.u32 %s34, 1
        %s244 = smul.addr %s243, 48
        %s245 = scalar_lea.vmem [#allocation2], %s244
        // Predicated region
        $region37: #{tpu_custom_call.1} parent=35 // pred_check
          %p246 = pneg %p47
        $region38: #{tpu_custom_call.1} parent=35 // pred_check_branch
          %248 = sbr.rel (%p246) target = $region40
        $region39: #{tpu_custom_call.1} parent=35 // pred_region
          %249 = dma.done %s242, 768
        $region40: #{tpu_custom_call.1} parent=35 // pred_fallthru
          _
        %s250 = sand.u32 %s60, 1
        %s251 = scalar_lea.sflag [#allocation6], %s250
        %s252 = sand.u32 %s60, 1
        %s253 = smul.addr %s252, 48
        %s254 = scalar_lea.vmem [#allocation5], %s253
        // Predicated region
        $region41: #{tpu_custom_call.1} parent=35 // pred_check
          %p255 = pneg %p73
        $region42: #{tpu_custom_call.1} parent=35 // pred_check_branch
          %257 = sbr.rel (%p255) target = $region44
        $region43: #{tpu_custom_call.1} parent=35 // pred_region
          %258 = dma.done %s251, 768
        $region44: #{tpu_custom_call.1} parent=35 // pred_fallthru
          _
        %s259 = sand.u32 %s34, 1
        %s260 = scalar_lea.sflag [#allocation3], %s259
        %s261 = sand.u32 %s34, 1
        %s262 = smul.addr %s261, 48
        %s263 = scalar_lea.vmem [#allocation2], %s262
        %p264 = pneg %p47
        %p265 = pneg %p44
        %s266 = sand.u32 %s60, 1
        %s267 = scalar_lea.sflag [#allocation6], %s266
        %s268 = sand.u32 %s60, 1
        %s269 = smul.addr %s268, 48
        %s270 = scalar_lea.vmem [#allocation5], %s269
        %p271 = pneg %p73
        %p272 = pneg %p70
        %p273 = pneg %p94
        %p274 = pneg %p91
        %p275 = pneg %p115
        %p276 = pneg %p112
        %p277 = pneg %p141
        %p278 = pneg %p138
        %s279 = sand.u32 %s128, 1
        %s280 = scalar_lea.sflag [#allocation4], %s279
        %s281 = sand.u32 %s128, 1
        %s282 = smul.addr %s281, 12
        %s283 = scalar_lea.vmem [#allocation7], %s282
        %p284 = pneg %p167
        %p285 = pneg %p164
        %p286 = scmp.lt.s32.totalorder %s26, 1
        %s287 = scalar_select %p286, %s26, 1
        %s288 = smul.addr %s287, 4
        %s289 = scalar_lea.vmem %s5, %s288
        %p290 = scmp.lt.s32.totalorder %s26, 1
        %s291 = scalar_select %p290, %s26, 1
        %s292 = smul.addr %s291, 4
        %s293 = scalar_lea.vmem %s5, %s292
        %v295 = vld [vmem:[%s2] sm:$0xf]
        %v296 = vpack.c.bf16 %v295, %v295
        %v297 = vld [vmem:[%s3] sm:$0xff]
        %v298 = vld [vmem:[%s3 + $0x8] sm:$0xff]
        %v299 = vpack.c.bf16 %v298, %v297
        %300 = vst [vmem:[%s293] sm:$0x7] 0.0
        %v301 = vld [vmem:[%s245] sm:$0xff]
        %v302 = vld [vmem:[%s245 + $0x8] sm:$0xff]
        %v303 = vpack.c.bf16 %v302, %v301
        %v304 = vld [vmem:[%s254] sm:$0xff]
        %v305 = vld [vmem:[%s254 + $0x8] sm:$0xff]
        %v306 = vpack.c.bf16 %v305, %v304
        %vm307 = vcmask 130048
        %v309 = vsel %vm307, %v296, 0
        %311 = vmatprep.subr.bf16.mxu0 0
        %312 = vmatpush1.bf16.msra.mxu0 %v303
        %313 = vmatprep.subr.bf16.mxu0 0
        %314 = vmatpush1.bf16.msra.mxu0 0
        %315 = vmatprep.subr.bf16.mxu0 0
        %316 = vmatpush1.bf16.msra.mxu0 0
        %317 = vmatprep.subr.bf16.mxu0 0
        %318 = vmatpush1.bf16.msra.mxu0 0
        %319 = vmatprep.subr.bf16.mxu0 0
        %320 = vmatpush1.bf16.msra.mxu0 0
        %321 = vmatprep.subr.bf16.mxu0 0
        %322 = vmatpush1.bf16.msra.mxu0 0
        %323 = vmatprep.subr.bf16.mxu0 0
        %324 = vmatpush1.bf16.msra.mxu0 0
        %325 = vmatprep.subr.bf16.mxu0 0
        %326 = vmatpush1.bf16.msra.mxu0 0
        %327 = vmatprep.subr.bf16.mxu0 0
        %328 = vmatpush1.bf16.msra.mxu0 0
        %329 = vmatprep.subr.bf16.mxu0 0
        %330 = vmatpush1.bf16.msra.mxu0 0
        %331 = vmatprep.subr.bf16.mxu0 0
        %332 = vmatpush1.bf16.msra.mxu0 0
        %333 = vmatprep.subr.bf16.mxu0 0
        %334 = vmatpush1.bf16.msra.mxu0 0
        %335 = vmatprep.subr.bf16.mxu0 0
        %336 = vmatpush1.bf16.msra.mxu0 0
        %337 = vmatprep.subr.bf16.mxu0 0
        %338 = vmatpush1.bf16.msra.mxu0 0
        %339 = vmatprep.subr.bf16.mxu0 0
        %340 = vmatpush1.bf16.msra.mxu0 0
        %341 = vmatprep.subr.bf16.mxu0 0
        %342 = vmatpush1.bf16.msra.mxu0 0
        %343 = vmatprep.mubr.bf16.mxu0 0
        %344 = vmatmul.mubr.bf16.gmra.mrb[0].mxu0 %v309
        %v345 = vpop.f32.mrb[0].mxu0
        %v346 = vadd.f32 0.0, %v345
        %v347 = vpop.f32.mrb[0].mxu0
        %v348 = vpop.f32.mrb[0].mxu0
        %v349 = vpop.f32.mrb[0].mxu0
        %350 = vdwg.mxu0
        %351 = vmatprep.subr.bf16.mxu0 0
        %352 = vmatpush1.bf16.msra.mxu0 %v306
        %353 = vmatprep.subr.bf16.mxu0 0
        %354 = vmatpush1.bf16.msra.mxu0 0
        %355 = vmatprep.subr.bf16.mxu0 0
        %356 = vmatpush1.bf16.msra.mxu0 0
        %357 = vmatprep.subr.bf16.mxu0 0
        %358 = vmatpush1.bf16.msra.mxu0 0
        %359 = vmatprep.subr.bf16.mxu0 0
        %360 = vmatpush1.bf16.msra.mxu0 0
        %361 = vmatprep.subr.bf16.mxu0 0
        %362 = vmatpush1.bf16.msra.mxu0 0
        %363 = vmatprep.subr.bf16.mxu0 0
        %364 = vmatpush1.bf16.msra.mxu0 0
        %365 = vmatprep.subr.bf16.mxu0 0
        %366 = vmatpush1.bf16.msra.mxu0 0
        %367 = vmatprep.subr.bf16.mxu0 0
        %368 = vmatpush1.bf16.msra.mxu0 0
        %369 = vmatprep.subr.bf16.mxu0 0
        %370 = vmatpush1.bf16.msra.mxu0 0
        %371 = vmatprep.subr.bf16.mxu0 0
        %372 = vmatpush1.bf16.msra.mxu0 0
        %373 = vmatprep.subr.bf16.mxu0 0
        %374 = vmatpush1.bf16.msra.mxu0 0
        %375 = vmatprep.subr.bf16.mxu0 0
        %376 = vmatpush1.bf16.msra.mxu0 0
        %377 = vmatprep.subr.bf16.mxu0 0
        %378 = vmatpush1.bf16.msra.mxu0 0
        %379 = vmatprep.subr.bf16.mxu0 0
        %380 = vmatpush1.bf16.msra.mxu0 0
        %381 = vmatprep.subr.bf16.mxu0 0
        %382 = vmatpush1.bf16.msra.mxu0 0
        %383 = vmatprep.mubr.bf16.mxu0 0
        %384 = vmatmul.mubr.bf16.gmra.mrb[0].mxu0 %v309
        %v385 = vpop.f32.mrb[0].mxu0
        %v386 = vadd.f32 0.0, %v385
        %v387 = vpop.f32.mrb[0].mxu0
        %v388 = vpop.f32.mrb[0].mxu0
        %v389 = vpop.f32.mrb[0].mxu0
        %390 = vdwg.mxu0
        %v391 = vpack.c.bf16 %v346, %v346
        %v392 = vpack.c.bf16 %v386, %v386
        %v394 = vsel %vm307, %v392, 0
        %396 = vmatprep.subr.bf16.mxu0 0
        %397 = vmatpush1.bf16.msra.mxu0 %v299
        %398 = vmatprep.subr.bf16.mxu0 0
        %399 = vmatpush1.bf16.msra.mxu0 0
        %400 = vmatprep.subr.bf16.mxu0 0
        %401 = vmatpush1.bf16.msra.mxu0 0
        %402 = vmatprep.subr.bf16.mxu0 0
        %403 = vmatpush1.bf16.msra.mxu0 0
        %404 = vmatprep.subr.bf16.mxu0 0
        %405 = vmatpush1.bf16.msra.mxu0 0
        %406 = vmatprep.subr.bf16.mxu0 0
        %407 = vmatpush1.bf16.msra.mxu0 0
        %408 = vmatprep.subr.bf16.mxu0 0
        %409 = vmatpush1.bf16.msra.mxu0 0
        %410 = vmatprep.subr.bf16.mxu0 0
        %411 = vmatpush1.bf16.msra.mxu0 0
        %412 = vmatprep.subr.bf16.mxu0 0
        %413 = vmatpush1.bf16.msra.mxu0 0
        %414 = vmatprep.subr.bf16.mxu0 0
        %415 = vmatpush1.bf16.msra.mxu0 0
        %416 = vmatprep.subr.bf16.mxu0 0
        %417 = vmatpush1.bf16.msra.mxu0 0
        %418 = vmatprep.subr.bf16.mxu0 0
        %419 = vmatpush1.bf16.msra.mxu0 0
        %420 = vmatprep.subr.bf16.mxu0 0
        %421 = vmatpush1.bf16.msra.mxu0 0
        %422 = vmatprep.subr.bf16.mxu0 0
        %423 = vmatpush1.bf16.msra.mxu0 0
        %424 = vmatprep.subr.bf16.mxu0 0
        %425 = vmatpush1.bf16.msra.mxu0 0
        %426 = vmatprep.subr.bf16.mxu0 0
        %427 = vmatpush1.bf16.msra.mxu0 0
        %428 = vmatprep.mubr.bf16.mxu0 0
        %429 = vmatmul.mubr.bf16.gmra.mrb[0].mxu0 %v394
        %v430 = vpop.f32.mrb[0].mxu0
        %v431 = vadd.f32 0.0, %v430
        %v432 = vpop.f32.mrb[0].mxu0
        %v433 = vpop.f32.mrb[0].mxu0
        %v434 = vpop.f32.mrb[0].mxu0
        %435 = vdwg.mxu0
        %v437 = vsel %vm307, %v391, 0
        %439 = vmatprep.subr.bf16.mxu0 0
        %440 = vmatpush1.bf16.msra.mxu0 %v299
        %441 = vmatprep.subr.bf16.mxu0 0
        %442 = vmatpush1.bf16.msra.mxu0 0
        %443 = vmatprep.subr.bf16.mxu0 0
        %444 = vmatpush1.bf16.msra.mxu0 0
        %445 = vmatprep.subr.bf16.mxu0 0
        %446 = vmatpush1.bf16.msra.mxu0 0
        %447 = vmatprep.subr.bf16.mxu0 0
        %448 = vmatpush1.bf16.msra.mxu0 0
        %449 = vmatprep.subr.bf16.mxu0 0
        %450 = vmatpush1.bf16.msra.mxu0 0
        %451 = vmatprep.subr.bf16.mxu0 0
        %452 = vmatpush1.bf16.msra.mxu0 0
        %453 = vmatprep.subr.bf16.mxu0 0
        %454 = vmatpush1.bf16.msra.mxu0 0
        %455 = vmatprep.subr.bf16.mxu0 0
        %456 = vmatpush1.bf16.msra.mxu0 0
        %457 = vmatprep.subr.bf16.mxu0 0
        %458 = vmatpush1.bf16.msra.mxu0 0
        %459 = vmatprep.subr.bf16.mxu0 0
        %460 = vmatpush1.bf16.msra.mxu0 0
        %461 = vmatprep.subr.bf16.mxu0 0
        %462 = vmatpush1.bf16.msra.mxu0 0
        %463 = vmatprep.subr.bf16.mxu0 0
        %464 = vmatpush1.bf16.msra.mxu0 0
        %465 = vmatprep.subr.bf16.mxu0 0
        %466 = vmatpush1.bf16.msra.mxu0 0
        %467 = vmatprep.subr.bf16.mxu0 0
        %468 = vmatpush1.bf16.msra.mxu0 0
        %469 = vmatprep.subr.bf16.mxu0 0
        %470 = vmatpush1.bf16.msra.mxu0 0
        %471 = vmatprep.mubr.bf16.mxu0 0
        %472 = vmatmul.mubr.bf16.gmra.mrb[0].mxu0 %v437
        %v473 = vpop.f32.mrb[0].mxu0
        %v474 = vadd.f32 %v431, %v473
        %v475 = vpop.f32.mrb[0].mxu0
        %v476 = vpop.f32.mrb[0].mxu0
        %v477 = vpop.f32.mrb[0].mxu0
        %478 = vdwg.mxu0
        %vm479 = vcmask 27648
        %480 = vst.msk [vmem:[%s283] sm:$0xf] %vm479, %v474
        %vm481 = vcmask 24576
        %482 = vst.msk [vmem:[%s293] sm:$0x1] %vm481, %v431
        %484 = vrot.lane.b32.xlu0 %v431, 4
        %v485 = vpop.permute.xlu0 %484
        %vm487 = vcmask 58401
        %488 = vst.msk [vmem:[%s293 - $0x1] sm:$0x2] %vm487, %v485
        %489 = vrot.lane.b32.xlu0 %v431, 8
        %v490 = vpop.permute.xlu0 %489
        %vm492 = vcmask 92226
        %493 = vst.msk [vmem:[%s293 - $0x2] sm:$0x4] %vm492, %v490
        %494 = vrot.lane.b32.xlu0 %v431, 12
        %v495 = vpop.permute.xlu0 %494
        %vm497 = vcmask 126051
        %498 = vst.msk [vmem:[%s293 - $0x3] sm:$0x8] %vm497, %v495
        %s499 = scalar_lea.vmem %s245, 16 [#allocation2]
        %v500 = vld [vmem:[%s499] sm:$0xff]
        %v501 = vld [vmem:[%s499 + $0x8] sm:$0xff]
        %v502 = vpack.c.bf16 %v501, %v500
        %s503 = scalar_lea.vmem %s254, 16 [#allocation5]
        %v504 = vld [vmem:[%s503] sm:$0xff]
        %v505 = vld [vmem:[%s503 + $0x8] sm:$0xff]
        %v506 = vpack.c.bf16 %v505, %v504
        %507 = vmatprep.subr.bf16.mxu0 0
        %508 = vmatpush1.bf16.msra.mxu0 %v502
        %509 = vmatprep.subr.bf16.mxu0 0
        %510 = vmatpush1.bf16.msra.mxu0 0
        %511 = vmatprep.subr.bf16.mxu0 0
        %512 = vmatpush1.bf16.msra.mxu0 0
        %513 = vmatprep.subr.bf16.mxu0 0
        %514 = vmatpush1.bf16.msra.mxu0 0
        %515 = vmatprep.subr.bf16.mxu0 0
        %516 = vmatpush1.bf16.msra.mxu0 0
        %517 = vmatprep.subr.bf16.mxu0 0
        %518 = vmatpush1.bf16.msra.mxu0 0
        %519 = vmatprep.subr.bf16.mxu0 0
        %520 = vmatpush1.bf16.msra.mxu0 0
        %521 = vmatprep.subr.bf16.mxu0 0
        %522 = vmatpush1.bf16.msra.mxu0 0
        %523 = vmatprep.subr.bf16.mxu0 0
        %524 = vmatpush1.bf16.msra.mxu0 0
        %525 = vmatprep.subr.bf16.mxu0 0
        %526 = vmatpush1.bf16.msra.mxu0 0
        %527 = vmatprep.subr.bf16.mxu0 0
        %528 = vmatpush1.bf16.msra.mxu0 0
        %529 = vmatprep.subr.bf16.mxu0 0
        %530 = vmatpush1.bf16.msra.mxu0 0
        %531 = vmatprep.subr.bf16.mxu0 0
        %532 = vmatpush1.bf16.msra.mxu0 0
        %533 = vmatprep.subr.bf16.mxu0 0
        %534 = vmatpush1.bf16.msra.mxu0 0
        %535 = vmatprep.subr.bf16.mxu0 0
        %536 = vmatpush1.bf16.msra.mxu0 0
        %537 = vmatprep.subr.bf16.mxu0 0
        %538 = vmatpush1.bf16.msra.mxu0 0
        %539 = vmatprep.mubr.bf16.mxu0 0
        %540 = vmatmul.mubr.bf16.gmra.mrb[0].mxu0 %v309
        %v541 = vpop.f32.mrb[0].mxu0
        %v542 = vadd.f32 0.0, %v541
        %v543 = vpop.f32.mrb[0].mxu0
        %v544 = vpop.f32.mrb[0].mxu0
        %v545 = vpop.f32.mrb[0].mxu0
        %546 = vdwg.mxu0
        %547 = vmatprep.subr.bf16.mxu0 0
        %548 = vmatpush1.bf16.msra.mxu0 %v506
        %549 = vmatprep.subr.bf16.mxu0 0
        %550 = vmatpush1.bf16.msra.mxu0 0
        %551 = vmatprep.subr.bf16.mxu0 0
        %552 = vmatpush1.bf16.msra.mxu0 0
        %553 = vmatprep.subr.bf16.mxu0 0
        %554 = vmatpush1.bf16.msra.mxu0 0
        %555 = vmatprep.subr.bf16.mxu0 0
        %556 = vmatpush1.bf16.msra.mxu0 0
        %557 = vmatprep.subr.bf16.mxu0 0
        %558 = vmatpush1.bf16.msra.mxu0 0
        %559 = vmatprep.subr.bf16.mxu0 0
        %560 = vmatpush1.bf16.msra.mxu0 0
        %561 = vmatprep.subr.bf16.mxu0 0
        %562 = vmatpush1.bf16.msra.mxu0 0
        %563 = vmatprep.subr.bf16.mxu0 0
        %564 = vmatpush1.bf16.msra.mxu0 0
        %565 = vmatprep.subr.bf16.mxu0 0
        %566 = vmatpush1.bf16.msra.mxu0 0
        %567 = vmatprep.subr.bf16.mxu0 0
        %568 = vmatpush1.bf16.msra.mxu0 0
        %569 = vmatprep.subr.bf16.mxu0 0
        %570 = vmatpush1.bf16.msra.mxu0 0
        %571 = vmatprep.subr.bf16.mxu0 0
        %572 = vmatpush1.bf16.msra.mxu0 0
        %573 = vmatprep.subr.bf16.mxu0 0
        %574 = vmatpush1.bf16.msra.mxu0 0
        %575 = vmatprep.subr.bf16.mxu0 0
        %576 = vmatpush1.bf16.msra.mxu0 0
        %577 = vmatprep.subr.bf16.mxu0 0
        %578 = vmatpush1.bf16.msra.mxu0 0
        %579 = vmatprep.mubr.bf16.mxu0 0
        %580 = vmatmul.mubr.bf16.gmra.mrb[0].mxu0 %v309
        %v581 = vpop.f32.mrb[0].mxu0
        %v582 = vadd.f32 0.0, %v581
        %v583 = vpop.f32.mrb[0].mxu0
        %v584 = vpop.f32.mrb[0].mxu0
        %v585 = vpop.f32.mrb[0].mxu0
        %586 = vdwg.mxu0
        %v587 = vpack.c.bf16 %v542, %v542
        %v588 = vpack.c.bf16 %v582, %v582
        %v590 = vsel %vm307, %v588, 0
        %592 = vmatprep.subr.bf16.mxu0 0
        %593 = vmatpush1.bf16.msra.mxu0 %v299
        %594 = vmatprep.subr.bf16.mxu0 0
        %595 = vmatpush1.bf16.msra.mxu0 0
        %596 = vmatprep.subr.bf16.mxu0 0
        %597 = vmatpush1.bf16.msra.mxu0 0
        %598 = vmatprep.subr.bf16.mxu0 0
        %599 = vmatpush1.bf16.msra.mxu0 0
        %600 = vmatprep.subr.bf16.mxu0 0
        %601 = vmatpush1.bf16.msra.mxu0 0
        %602 = vmatprep.subr.bf16.mxu0 0
        %603 = vmatpush1.bf16.msra.mxu0 0
        %604 = vmatprep.subr.bf16.mxu0 0
        %605 = vmatpush1.bf16.msra.mxu0 0
        %606 = vmatprep.subr.bf16.mxu0 0
        %607 = vmatpush1.bf16.msra.mxu0 0
        %608 = vmatprep.subr.bf16.mxu0 0
        %609 = vmatpush1.bf16.msra.mxu0 0
        %610 = vmatprep.subr.bf16.mxu0 0
        %611 = vmatpush1.bf16.msra.mxu0 0
        %612 = vmatprep.subr.bf16.mxu0 0
        %613 = vmatpush1.bf16.msra.mxu0 0
        %614 = vmatprep.subr.bf16.mxu0 0
        %615 = vmatpush1.bf16.msra.mxu0 0
        %616 = vmatprep.subr.bf16.mxu0 0
        %617 = vmatpush1.bf16.msra.mxu0 0
        %618 = vmatprep.subr.bf16.mxu0 0
        %619 = vmatpush1.bf16.msra.mxu0 0
        %620 = vmatprep.subr.bf16.mxu0 0
        %621 = vmatpush1.bf16.msra.mxu0 0
        %622 = vmatprep.subr.bf16.mxu0 0
        %623 = vmatpush1.bf16.msra.mxu0 0
        %624 = vmatprep.mubr.bf16.mxu0 0
        %625 = vmatmul.mubr.bf16.gmra.mrb[0].mxu0 %v590
        %v626 = vpop.f32.mrb[0].mxu0
        %v627 = vadd.f32 0.0, %v626
        %v628 = vpop.f32.mrb[0].mxu0
        %v629 = vpop.f32.mrb[0].mxu0
        %v630 = vpop.f32.mrb[0].mxu0
        %631 = vdwg.mxu0
        %v633 = vsel %vm307, %v587, 0
        %635 = vmatprep.subr.bf16.mxu0 0
        %636 = vmatpush1.bf16.msra.mxu0 %v299
        %637 = vmatprep.subr.bf16.mxu0 0
        %638 = vmatpush1.bf16.msra.mxu0 0
        %639 = vmatprep.subr.bf16.mxu0 0
        %640 = vmatpush1.bf16.msra.mxu0 0
        %641 = vmatprep.subr.bf16.mxu0 0
        %642 = vmatpush1.bf16.msra.mxu0 0
        %643 = vmatprep.subr.bf16.mxu0 0
        %644 = vmatpush1.bf16.msra.mxu0 0
        %645 = vmatprep.subr.bf16.mxu0 0
        %646 = vmatpush1.bf16.msra.mxu0 0
        %647 = vmatprep.subr.bf16.mxu0 0
        %648 = vmatpush1.bf16.msra.mxu0 0
        %649 = vmatprep.subr.bf16.mxu0 0
        %650 = vmatpush1.bf16.msra.mxu0 0
        %651 = vmatprep.subr.bf16.mxu0 0
        %652 = vmatpush1.bf16.msra.mxu0 0
        %653 = vmatprep.subr.bf16.mxu0 0
        %654 = vmatpush1.bf16.msra.mxu0 0
        %655 = vmatprep.subr.bf16.mxu0 0
        %656 = vmatpush1.bf16.msra.mxu0 0
        %657 = vmatprep.subr.bf16.mxu0 0
        %658 = vmatpush1.bf16.msra.mxu0 0
        %659 = vmatprep.subr.bf16.mxu0 0
        %660 = vmatpush1.bf16.msra.mxu0 0
        %661 = vmatprep.subr.bf16.mxu0 0
        %662 = vmatpush1.bf16.msra.mxu0 0
        %663 = vmatprep.subr.bf16.mxu0 0
        %664 = vmatpush1.bf16.msra.mxu0 0
        %665 = vmatprep.subr.bf16.mxu0 0
        %666 = vmatpush1.bf16.msra.mxu0 0
        %667 = vmatprep.mubr.bf16.mxu0 0
        %668 = vmatmul.mubr.bf16.gmra.mrb[0].mxu0 %v633
        %v669 = vpop.f32.mrb[0].mxu0
        %v670 = vadd.f32 %v627, %v669
        %v671 = vpop.f32.mrb[0].mxu0
        %v672 = vpop.f32.mrb[0].mxu0
        %v673 = vpop.f32.mrb[0].mxu0
        %674 = vdwg.mxu0
        %s675 = scalar_lea.vmem %s283, 4 [#allocation7]
        %676 = vst.msk [vmem:[%s675] sm:$0xf] %vm479, %v670
        %677 = vst.msk [vmem:[%s293 + $0x1] sm:$0x1] %vm481, %v627
        %679 = vrot.lane.b32.xlu0 %v627, 4
        %v680 = vpop.permute.xlu0 %679
        %682 = vst.msk [vmem:[%s293] sm:$0x2] %vm487, %v680
        %683 = vrot.lane.b32.xlu0 %v627, 8
        %v684 = vpop.permute.xlu0 %683
        %686 = vst.msk [vmem:[%s293 - $0x1] sm:$0x4] %vm492, %v684
        %687 = vrot.lane.b32.xlu0 %v627, 12
        %v688 = vpop.permute.xlu0 %687
        %690 = vst.msk [vmem:[%s293 - $0x2] sm:$0x8] %vm497, %v688
        %s691 = scalar_lea.vmem %s245, 32 [#allocation2]
        %v692 = vld [vmem:[%s691] sm:$0xff]
        %v693 = vld [vmem:[%s691 + $0x8] sm:$0xff]
        %v694 = vpack.c.bf16 %v693, %v692
        %s695 = scalar_lea.vmem %s254, 32 [#allocation5]
        %v696 = vld [vmem:[%s695] sm:$0xff]
        %v697 = vld [vmem:[%s695 + $0x8] sm:$0xff]
        %v698 = vpack.c.bf16 %v697, %v696
        %699 = vmatprep.subr.bf16.mxu0 0
        %700 = vmatpush1.bf16.msra.mxu0 %v694
        %701 = vmatprep.subr.bf16.mxu0 0
        %702 = vmatpush1.bf16.msra.mxu0 0
        %703 = vmatprep.subr.bf16.mxu0 0
        %704 = vmatpush1.bf16.msra.mxu0 0
        %705 = vmatprep.subr.bf16.mxu0 0
        %706 = vmatpush1.bf16.msra.mxu0 0
        %707 = vmatprep.subr.bf16.mxu0 0
        %708 = vmatpush1.bf16.msra.mxu0 0
        %709 = vmatprep.subr.bf16.mxu0 0
        %710 = vmatpush1.bf16.msra.mxu0 0
        %711 = vmatprep.subr.bf16.mxu0 0
        %712 = vmatpush1.bf16.msra.mxu0 0
        %713 = vmatprep.subr.bf16.mxu0 0
        %714 = vmatpush1.bf16.msra.mxu0 0
        %715 = vmatprep.subr.bf16.mxu0 0
        %716 = vmatpush1.bf16.msra.mxu0 0
        %717 = vmatprep.subr.bf16.mxu0 0
        %718 = vmatpush1.bf16.msra.mxu0 0
        %719 = vmatprep.subr.bf16.mxu0 0
        %720 = vmatpush1.bf16.msra.mxu0 0
        %721 = vmatprep.subr.bf16.mxu0 0
        %722 = vmatpush1.bf16.msra.mxu0 0
        %723 = vmatprep.subr.bf16.mxu0 0
        %724 = vmatpush1.bf16.msra.mxu0 0
        %725 = vmatprep.subr.bf16.mxu0 0
        %726 = vmatpush1.bf16.msra.mxu0 0
        %727 = vmatprep.subr.bf16.mxu0 0
        %728 = vmatpush1.bf16.msra.mxu0 0
        %729 = vmatprep.subr.bf16.mxu0 0
        %730 = vmatpush1.bf16.msra.mxu0 0
        %731 = vmatprep.mubr.bf16.mxu0 0
        %732 = vmatmul.mubr.bf16.gmra.mrb[0].mxu0 %v309
        %v733 = vpop.f32.mrb[0].mxu0
        %v734 = vadd.f32 0.0, %v733
        %v735 = vpop.f32.mrb[0].mxu0
        %v736 = vpop.f32.mrb[0].mxu0
        %v737 = vpop.f32.mrb[0].mxu0
        %738 = vdwg.mxu0
        %739 = vmatprep.subr.bf16.mxu0 0
        %740 = vmatpush1.bf16.msra.mxu0 %v698
        %741 = vmatprep.subr.bf16.mxu0 0
        %742 = vmatpush1.bf16.msra.mxu0 0
        %743 = vmatprep.subr.bf16.mxu0 0
        %744 = vmatpush1.bf16.msra.mxu0 0
        %745 = vmatprep.subr.bf16.mxu0 0
        %746 = vmatpush1.bf16.msra.mxu0 0
        %747 = vmatprep.subr.bf16.mxu0 0
        %748 = vmatpush1.bf16.msra.mxu0 0
        %749 = vmatprep.subr.bf16.mxu0 0
        %750 = vmatpush1.bf16.msra.mxu0 0
        %751 = vmatprep.subr.bf16.mxu0 0
        %752 = vmatpush1.bf16.msra.mxu0 0
        %753 = vmatprep.subr.bf16.mxu0 0
        %754 = vmatpush1.bf16.msra.mxu0 0
        %755 = vmatprep.subr.bf16.mxu0 0
        %756 = vmatpush1.bf16.msra.mxu0 0
        %757 = vmatprep.subr.bf16.mxu0 0
        %758 = vmatpush1.bf16.msra.mxu0 0
        %759 = vmatprep.subr.bf16.mxu0 0
        %760 = vmatpush1.bf16.msra.mxu0 0
        %761 = vmatprep.subr.bf16.mxu0 0
        %762 = vmatpush1.bf16.msra.mxu0 0
        %763 = vmatprep.subr.bf16.mxu0 0
        %764 = vmatpush1.bf16.msra.mxu0 0
        %765 = vmatprep.subr.bf16.mxu0 0
        %766 = vmatpush1.bf16.msra.mxu0 0
        %767 = vmatprep.subr.bf16.mxu0 0
        %768 = vmatpush1.bf16.msra.mxu0 0
        %769 = vmatprep.subr.bf16.mxu0 0
        %770 = vmatpush1.bf16.msra.mxu0 0
        %771 = vmatprep.mubr.bf16.mxu0 0
        %772 = vmatmul.mubr.bf16.gmra.mrb[0].mxu0 %v309
        %v773 = vpop.f32.mrb[0].mxu0
        %v774 = vadd.f32 0.0, %v773
        %v775 = vpop.f32.mrb[0].mxu0
        %v776 = vpop.f32.mrb[0].mxu0
        %v777 = vpop.f32.mrb[0].mxu0
        %778 = vdwg.mxu0
        %v779 = vpack.c.bf16 %v734, %v734
        %v780 = vpack.c.bf16 %v774, %v774
        %v782 = vsel %vm307, %v780, 0
        %784 = vmatprep.subr.bf16.mxu0 0
        %785 = vmatpush1.bf16.msra.mxu0 %v299
        %786 = vmatprep.subr.bf16.mxu0 0
        %787 = vmatpush1.bf16.msra.mxu0 0
        %788 = vmatprep.subr.bf16.mxu0 0
        %789 = vmatpush1.bf16.msra.mxu0 0
        %790 = vmatprep.subr.bf16.mxu0 0
        %791 = vmatpush1.bf16.msra.mxu0 0
        %792 = vmatprep.subr.bf16.mxu0 0
        %793 = vmatpush1.bf16.msra.mxu0 0
        %794 = vmatprep.subr.bf16.mxu0 0
        %795 = vmatpush1.bf16.msra.mxu0 0
        %796 = vmatprep.subr.bf16.mxu0 0
        %797 = vmatpush1.bf16.msra.mxu0 0
        %798 = vmatprep.subr.bf16.mxu0 0
        %799 = vmatpush1.bf16.msra.mxu0 0
        %800 = vmatprep.subr.bf16.mxu0 0
        %801 = vmatpush1.bf16.msra.mxu0 0
        %802 = vmatprep.subr.bf16.mxu0 0
        %803 = vmatpush1.bf16.msra.mxu0 0
        %804 = vmatprep.subr.bf16.mxu0 0
        %805 = vmatpush1.bf16.msra.mxu0 0
        %806 = vmatprep.subr.bf16.mxu0 0
        %807 = vmatpush1.bf16.msra.mxu0 0
        %808 = vmatprep.subr.bf16.mxu0 0
        %809 = vmatpush1.bf16.msra.mxu0 0
        %810 = vmatprep.subr.bf16.mxu0 0
        %811 = vmatpush1.bf16.msra.mxu0 0
        %812 = vmatprep.subr.bf16.mxu0 0
        %813 = vmatpush1.bf16.msra.mxu0 0
        %814 = vmatprep.subr.bf16.mxu0 0
        %815 = vmatpush1.bf16.msra.mxu0 0
        %816 = vmatprep.mubr.bf16.mxu0 0
        %817 = vmatmul.mubr.bf16.gmra.mrb[0].mxu0 %v782
        %v818 = vpop.f32.mrb[0].mxu0
        %v819 = vadd.f32 0.0, %v818
        %v820 = vpop.f32.mrb[0].mxu0
        %v821 = vpop.f32.mrb[0].mxu0
        %v822 = vpop.f32.mrb[0].mxu0
        %823 = vdwg.mxu0
        %v825 = vsel %vm307, %v779, 0
        %827 = vmatprep.subr.bf16.mxu0 0
        %828 = vmatpush1.bf16.msra.mxu0 %v299
        %829 = vmatprep.subr.bf16.mxu0 0
        %830 = vmatpush1.bf16.msra.mxu0 0
        %831 = vmatprep.subr.bf16.mxu0 0
        %832 = vmatpush1.bf16.msra.mxu0 0
        %833 = vmatprep.subr.bf16.mxu0 0
        %834 = vmatpush1.bf16.msra.mxu0 0
        %835 = vmatprep.subr.bf16.mxu0 0
        %836 = vmatpush1.bf16.msra.mxu0 0
        %837 = vmatprep.subr.bf16.mxu0 0
        %838 = vmatpush1.bf16.msra.mxu0 0
        %839 = vmatprep.subr.bf16.mxu0 0
        %840 = vmatpush1.bf16.msra.mxu0 0
        %841 = vmatprep.subr.bf16.mxu0 0
        %842 = vmatpush1.bf16.msra.mxu0 0
        %843 = vmatprep.subr.bf16.mxu0 0
        %844 = vmatpush1.bf16.msra.mxu0 0
        %845 = vmatprep.subr.bf16.mxu0 0
        %846 = vmatpush1.bf16.msra.mxu0 0
        %847 = vmatprep.subr.bf16.mxu0 0
        %848 = vmatpush1.bf16.msra.mxu0 0
        %849 = vmatprep.subr.bf16.mxu0 0
        %850 = vmatpush1.bf16.msra.mxu0 0
        %851 = vmatprep.subr.bf16.mxu0 0
        %852 = vmatpush1.bf16.msra.mxu0 0
        %853 = vmatprep.subr.bf16.mxu0 0
        %854 = vmatpush1.bf16.msra.mxu0 0
        %855 = vmatprep.subr.bf16.mxu0 0
        %856 = vmatpush1.bf16.msra.mxu0 0
        %857 = vmatprep.subr.bf16.mxu0 0
        %858 = vmatpush1.bf16.msra.mxu0 0
        %859 = vmatprep.mubr.bf16.mxu0 0
        %860 = vmatmul.mubr.bf16.gmra.mrb[0].mxu0 %v825
        %v861 = vpop.f32.mrb[0].mxu0
        %v862 = vadd.f32 %v819, %v861
        %v863 = vpop.f32.mrb[0].mxu0
        %v864 = vpop.f32.mrb[0].mxu0
        %v865 = vpop.f32.mrb[0].mxu0
        %866 = vdwg.mxu0
        %s867 = scalar_lea.vmem %s283, 8 [#allocation7]
        %868 = vst.msk [vmem:[%s867] sm:$0xf] %vm479, %v862
        %869 = vst.msk [vmem:[%s293 + $0x2] sm:$0x1] %vm481, %v819
        %871 = vrot.lane.b32.xlu0 %v819, 4
        %v872 = vpop.permute.xlu0 %871
        %874 = vst.msk [vmem:[%s293 + $0x1] sm:$0x2] %vm487, %v872
        %875 = vrot.lane.b32.xlu0 %v819, 8
        %v876 = vpop.permute.xlu0 %875
        %878 = vst.msk [vmem:[%s293] sm:$0x4] %vm492, %v876
        %879 = vrot.lane.b32.xlu0 %v819, 12
        %v880 = vpop.permute.xlu0 %879
        %882 = vst.msk [vmem:[%s293 - $0x1] sm:$0x8] %vm497, %v880
        %s883 = sand.u32 %s128, 1
        %s884 = scalar_lea.sflag [#allocation4], %s883
        %s885 = sand.u32 %s128, 1
        %s886 = smul.addr %s885, 12
        %s887 = scalar_lea.vmem [#allocation7], %s886
        %p888 = scmp.lt.s32.totalorder %s26, 1
        %s889 = scalar_select %p888, %s26, 1
        %s890 = smul.addr %s889, 4
        %s891 = scalar_lea.vmem %s5, %s890
        // Predicated region
        $region45: #{tpu_custom_call.1} parent=35 // pred_check
          %p892 = pneg %p138
        $region46: #{tpu_custom_call.1} parent=35 // pred_check_branch
          %894 = sbr.rel (%p892) target = $region48
        $region47: #{tpu_custom_call.1} parent=35 // pred_region
          %s896 = ssub.s32 192, 192
          %897 = vsyncadd %s884, %s896
          %s898 = smul.addr %s26, 3
          %s899 = smul.addr %s898, 64
          %s900 = scalar_lea.hbm %s4, %s899
          %s901 = sshll.u32 %s887, 4
          %s902 = int_to_ptr.vmem [resolvable:$true] %s901
          %907 = dma.vmem_to_hbm [thread:$0]  %s902, 192, %s900, %s884, 64, 64, 4
        $region48: #{tpu_custom_call.1} parent=35 // pred_fallthru
          _
        // Predicated region
        $region49: #{tpu_custom_call.1} parent=35 // pred_check
          %p908 = pneg %p164
        $region50: #{tpu_custom_call.1} parent=35 // pred_check_branch
          %910 = sbr.rel (%p908) target = $region52
        $region51: #{tpu_custom_call.1} parent=35 // pred_region
          _
        $region52: #{tpu_custom_call.1} parent=35 // pred_fallthru
          _
      $region36: #{tpu_custom_call.1} parent=5 // pred_fallthru
        _
      %p911 = scmp.le.s32.totalorder 2, %s21
      // Predicated region
      $region53: #{tpu_custom_call.1} parent=5 // pred_check
        %p912 = pneg %p911
      $region54: #{tpu_custom_call.1} parent=5 // pred_check_branch
        %914 = sbr.rel (%p912) target = $region56
      $region55: #{tpu_custom_call.1} parent=5 // pred_region
        %s915 = ssub.s32 %s21, 2
        // Predicated region
        $region57: #{tpu_custom_call.1} parent=55 // pred_check
          %p916 = pneg %p144
        $region58: #{tpu_custom_call.1} parent=55 // pred_check_branch
          %918 = sbr.rel (%p916) target = $region60
        $region59: #{tpu_custom_call.1} parent=55 // pred_region
          %s919 = sand.u32 %s129, 1
          %s920 = scalar_lea.sflag [#allocation4], %s919
          %s921 = sand.u32 %s129, 1
          %s922 = smul.addr %s921, 12
          %s923 = scalar_lea.vmem [#allocation7], %s922
          %924 = dma.done %s920, 192
        $region60: #{tpu_custom_call.1} parent=55 // pred_fallthru
          _
        // Predicated region
        $region61: #{tpu_custom_call.1} parent=55 // pred_check
          %p925 = pneg %p170
        $region62: #{tpu_custom_call.1} parent=55 // pred_check_branch
          %927 = sbr.rel (%p925) target = $region64
        $region63: #{tpu_custom_call.1} parent=55 // pred_region
          %p928 = scmp.lt.s32.totalorder %s27, 1
          %s929 = scalar_select %p928, %s27, 1
          %s930 = smul.addr %s929, 4
          %s931 = scalar_lea.vmem %s5, %s930
        $region64: #{tpu_custom_call.1} parent=55 // pred_fallthru
          _
      $region56: #{tpu_custom_call.1} parent=5 // pred_fallthru
        _
    $region6: #{tpu_custom_call.1} parent=1 // loop_footer
      %s25 = sadd.s32 1, %s21
    $region7: #{tpu_custom_call.1} parent=1 // loop_footer_branch
      %20 = sbr.rel target = $region3
    $region8: #{tpu_custom_call.1} parent=1 // loop_exit
      _
    %932 = vsyncpa [#allocation3], 1
    %s933 = scalar_lea.sflag [#allocation3], 1
    %934 = vsyncpa %s933, 1
    %935 = vsyncpa [#allocation6], 1
    %s936 = scalar_lea.sflag [#allocation6], 1
    %937 = vsyncpa %s936, 1
    %938 = vsyncpa [#allocation4], 1
    %s939 = scalar_lea.sflag [#allocation4], 1
    %940 = vsyncpa %s939, 1

</llo_original>
